<compile_context>
chip_gen: v7x
topology: tpu7x:2x2x1
jax: 0.10.0
libtpu: 0.0.40
codegen_flags: <defaults>
</compile_context>

<pallas_src>
import jax
import jax.numpy as jnp
from jax.experimental import pallas as pl
from jax.experimental.pallas import tpu as pltpu

BN_EPS = 1e-5


def _make_fused_decoder_kernel(H, W, Wp, Cin, C1, C2):
    """Fused decoding1+decoding2 kernel for one HxW image per grid step."""
    M = H * Wp                     # output positions per image (padded-width)
    L = (H + 2) * Wp + 2           # padded image + 1 zero sentinel at each end

    def kernel(mask_ref, x_ref, w1_ref, b1_ref, w2_ref, b2_ref, o_ref,
               h_ref, taps_ref):
        # ---------- decoding1: conv3x3 (BN folded) + bias + ReLU ------------
        # Stack the 9 taps along the contraction dim -> one big MXU matmul.
        for t in range(9):
            kh, kw = divmod(t, 3)
            off = kh * Wp + kw
            taps_ref[t * Cin:(t + 1) * Cin, :] = x_ref[:, off:off + M]
        acc1 = jnp.dot(w1_ref[...], taps_ref[0:9 * Cin, :],
                       preferred_element_type=jnp.float32)
        acc1 = acc1 + b1_ref[...]
        # ReLU + zero the per-row junk columns (they become decoding2's
        # horizontal zero padding).  mask is a resident 0/1 f32 input.
        h = jnp.maximum(acc1, 0.0) * mask_ref[...]              # (C1, M) f32

        # Stage decoding1's output as decoding2's padded input.  Only the
        # border (top pad row + bottom pad row + sentinels) needs zeroing.
        border = jnp.zeros((C1, Wp + 1), dtype=h_ref.dtype)
        h_ref[:, 0:Wp + 1] = border
        h_ref[:, Wp + 1 + M:] = border
        h_ref[:, Wp + 1:Wp + 1 + M] = h.astype(h_ref.dtype)

        # ---------- decoding2: conv3x3 (BN folded) + bias + ReLU ------------
        for t in range(9):
            kh, kw = divmod(t, 3)
            off = kh * Wp + kw
            taps_ref[t * C1:(t + 1) * C1, :] = h_ref[:, off:off + M]
        acc2 = jnp.dot(w2_ref[...], taps_ref[0:9 * C1, :],
                       preferred_element_type=jnp.float32)
        acc2 = acc2 + b2_ref[...]
        y = jnp.maximum(acc2, 0.0)                              # (C2, M) f32

        # Drop the pad columns inside the kernel and emit bf16 NCHW directly.
        o_ref[...] = y.reshape(C2, H, Wp)[:, :, 1:W + 1].astype(o_ref.dtype)

    return kernel


def _fold_bn_into_conv(conv_w, conv_b, gamma, beta, rmean, rvar):
    """Fold eval-mode BatchNorm into the conv weight/bias.

    conv_w: (Cout, Cin, 3, 3) OIHW.
    Returns:
      w_flat: (Cout, 9*Cin) bf16, column index = (kh*3 + kw)*Cin + cin
              (matches the stacked-tap scratch layout in the kernel)
      b_col : (Cout, 1) float32
    """
    cout, cin = conv_w.shape[0], conv_w.shape[1]
    scale = gamma / jnp.sqrt(rvar + BN_EPS)                      # (Cout,)
    w = conv_w * scale[:, None, None, None]                      # (Cout,Cin,3,3)
    w_flat = jnp.transpose(w, (0, 2, 3, 1)).reshape(cout, 9 * cin)
    b = (conv_b - rmean) * scale + beta
    return w_flat.astype(jnp.bfloat16), b.reshape(cout, 1).astype(jnp.float32)


def _pick_vmem_limit(requested_bytes):
    """Per-generation VMEM budget (no hard 32 MiB cap on v5e/v6e)."""
    try:
        phys = int(pltpu.get_tpu_info().vmem_capacity_bytes)
    except Exception:
        phys = 64 << 20                                 # conservative (v7x)
    cap = min(100 << 20, int(phys * 0.75))
    want = int(requested_bytes * 1.5) + (4 << 20)       # headroom for temporaries
    return int(min(max(want, 16 << 20), cap))


def decoder_module_forward(enc_fea_nchw, params):
    """Equivalent of decoder_module(fusing=False).forward(enc_fea, dec_fea=None).

    Returns bf16 NCHW (bf16 output halves HBM write traffic; cast in the
    caller if f32 is required).
    """
    N, Cin, H, W = enc_fea_nchw.shape
    w1, b1 = _fold_bn_into_conv(*params["decoding1"])    # (C1, 9*Cin), (C1,1)
    w2, b2 = _fold_bn_into_conv(*params["decoding2"])    # (C2, 9*C1),  (C2,1)
    C1 = w1.shape[0]
    C2 = w2.shape[0]

    # Row stride: align to 128 lanes only when W is large enough that the
    # relayout saving beats the lane waste; for small W keep Wp = W + 2.
    Wp = (W + 2) if W < 100 else (((W + 2) + 127) // 128) * 128
    M = H * Wp
    L = (H + 2) * Wp + 2              # + one zero sentinel at each end

    # Zero-pad spatially, flatten H/W in padded-width coords, add sentinels.
    # Stays channel-major, so no NCHW<->NHWC transpose anywhere.
    xb = enc_fea_nchw.astype(jnp.bfloat16)
    xp = jnp.pad(xb, ((0, 0), (0, 0), (1, 1), (1, Wp - W - 1)))   # (N,Cin,H+2,Wp)
    xflat = jnp.pad(xp.reshape(N, Cin, (H + 2) * Wp), ((0, 0), (0, 0), (1, 1)))

    # Grid-invariant interior mask (1 for real pixels, 0 for per-row pads).
    col = jnp.arange(M, dtype=jnp.int32) % Wp
    mask = ((col >= 1) & (col <= W)).astype(jnp.float32).reshape(1, M)

    kernel = _make_fused_decoder_kernel(H, W, Wp, Cin, C1, C2)

    # Real double-buffer VMEM sum: 2x (input block + output block + resident
    # operands) + scratches.
    in_bytes = Cin * L * 2
    out_bytes = C2 * H * W * 2
    res_bytes = (C1 * 9 * Cin + C2 * 9 * C1) * 2 + (C1 + C2) * 4 + M * 4
    scratch_bytes = C1 * L * 2 + 9 * max(Cin, C1) * M * 2
    vmem_limit = _pick_vmem_limit(
        2 * (in_bytes + out_bytes + res_bytes) + scratch_bytes)

    flops = 2 * N * M * 9 * (Cin * C1 + C1 * C2)
    bytes_accessed = N * (in_bytes + out_bytes) + res_bytes

    out = pl.pallas_call(
        kernel,
        out_shape=jax.ShapeDtypeStruct((N, C2, H, W), jnp.bfloat16),
        grid_spec=pltpu.PrefetchScalarGridSpec(
            num_scalar_prefetch=0,
            grid=(N,),                                            # parallel over batch
            in_specs=[
                pl.BlockSpec((1, M), lambda n: (0, 0)),              # interior mask
                pl.BlockSpec((None, Cin, L), lambda n: (n, 0, 0)),   # padded input
                pl.BlockSpec((C1, 9 * Cin), lambda n: (0, 0)),       # w1 (resident)
                pl.BlockSpec((C1, 1), lambda n: (0, 0)),             # b1
                pl.BlockSpec((C2, 9 * C1), lambda n: (0, 0)),        # w2 (resident)
                pl.BlockSpec((C2, 1), lambda n: (0, 0)),             # b2
            ],
            out_specs=pl.BlockSpec((None, C2, H, W), lambda n: (n, 0, 0, 0)),
            scratch_shapes=[
                pltpu.VMEM((C1, L), jnp.bfloat16),                   # decoding1 act
                pltpu.VMEM((9 * max(Cin, C1), M), jnp.bfloat16),     # stacked taps
            ],
        ),
        compiler_params=pltpu.CompilerParams(
            dimension_semantics=("parallel",),
            vmem_limit_bytes=vmem_limit),
        cost_estimate=pl.CostEstimate(flops=flops, transcendentals=0,
                                      bytes_accessed=bytes_accessed),
    )(mask, xflat, w1, b1, w2, b2)

    return out                                   # (N, C2, H, W) bf16, NCHW


def init_decoder_params(key, in_channels, out_channels):
    """Deterministic synthetic parameters for decoding1 / decoding2."""
    ks = jax.random.split(key, 4)

    def conv_block(kw, kb, cin, cout):
        w = jax.random.normal(kw, (cout, cin, 3, 3), jnp.float32) * 0.1
        b = jax.random.normal(kb, (cout,), jnp.float32) * 0.05
        gamma = jnp.linspace(0.8, 1.2, cout, dtype=jnp.float32)
        beta = jnp.linspace(-0.1, 0.1, cout, dtype=jnp.float32)
        rmean = jnp.linspace(-0.05, 0.05, cout, dtype=jnp.float32)
        rvar = jnp.linspace(0.9, 1.1, cout, dtype=jnp.float32)
        return (w, b, gamma, beta, rmean, rvar)

    return {
        "decoding1": conv_block(ks[0], ks[1], in_channels, out_channels),
        "decoding2": conv_block(ks[2], ks[3], out_channels, out_channels),
    }


def _reference_forward(enc_fea_nchw, params):
    """Pure-JAX (XLA conv, full f32) reference matching the PyTorch module."""
    def block(x, w, b, gamma, beta, rmean, rvar):
        y = jax.lax.conv_general_dilated(
            x, w, window_strides=(1, 1), padding="SAME",
            dimension_numbers=("NCHW", "OIHW", "NCHW"))
        y = y + b[None, :, None, None]
        y = (y - rmean[None, :, None, None]) / jnp.sqrt(
            rvar[None, :, None, None] + BN_EPS)
        y = gamma[None, :, None, None] * y + beta[None, :, None, None]
        return jnp.maximum(y, 0.0)

    y = block(enc_fea_nchw, *params["decoding1"])
    y = block(y, *params["decoding2"])
    return y


if __name__ == "__main__":
    key = jax.random.PRNGKey(0)
    k_x, k_p = jax.random.split(key)

    batch, in_channels, out_channels, spatial = 2, 4, 8, 16
    enc_fea = jax.random.normal(k_x, (batch, in_channels, spatial, spatial),
                                jnp.float32)
    params = init_decoder_params(k_p, in_channels, out_channels)

    fwd = jax.jit(decoder_module_forward)
    out = jax.block_until_ready(fwd(enc_fea, params))
    ref = jax.block_until_ready(_reference_forward(enc_fea, params))

    assert out.shape == (batch, out_channels, spatial, spatial), out.shape
    # Kernel uses bf16 operands / intermediate / output with f32 accumulation,
    # so compare against the full-f32 reference at bf16-level tolerance; any
    # structural bug (wrong tap / BN fold / padding) produces O(0.1+) errors.
    out_f32 = out.astype(jnp.float32)
    max_err = float(jnp.max(jnp.abs(out_f32 - ref)))
    assert jnp.allclose(out_f32, ref, atol=5e-2, rtol=5e-2), max_err

    print("KERNEL_OK")
</pallas_src>

<mosaic_0001>
module attributes {stable_mosaic.version = 11 : i64} {
  func.func @kernel(%arg0: i32, %arg1: memref<1x288xf32, #tpu.memory_space<vmem>>, %arg2: memref<1x4x326xbf16, #tpu.memory_space<vmem>>, %arg3: memref<8x36xbf16, #tpu.memory_space<vmem>>, %arg4: memref<8x1xf32, #tpu.memory_space<vmem>>, %arg5: memref<8x72xbf16, #tpu.memory_space<vmem>>, %arg6: memref<8x1xf32, #tpu.memory_space<vmem>>, %arg7: memref<1x8x16x16xbf16, #tpu.memory_space<vmem>>, %arg8: memref<8x326xbf16, #tpu.memory_space<vmem>>, %arg9: memref<72x288xbf16, #tpu.memory_space<vmem>>) attributes {dimension_semantics = [#tpu.dimension_semantics<parallel>], iteration_bounds = array<i64: 2>, scalar_prefetch = 0 : i64, scratch_operands = 2 : i64, tpu.core_type = #tpu.core_type<tc>, window_params = [{pipeline_mode = #tpu.pipeline_mode<synchronous>, transform_indices = @transform_0, window_bounds = array<i64: 1, 288>}, {transform_indices = @transform_1, window_bounds = array<i64: 1, 4, 326>}, {pipeline_mode = #tpu.pipeline_mode<synchronous>, transform_indices = @transform_2, window_bounds = array<i64: 8, 36>}, {pipeline_mode = #tpu.pipeline_mode<synchronous>, transform_indices = @transform_3, window_bounds = array<i64: 8, 1>}, {pipeline_mode = #tpu.pipeline_mode<synchronous>, transform_indices = @transform_4, window_bounds = array<i64: 8, 72>}, {pipeline_mode = #tpu.pipeline_mode<synchronous>, transform_indices = @transform_5, window_bounds = array<i64: 8, 1>}, {transform_indices = @transform_6, window_bounds = array<i64: 1, 8, 16, 16>}]} {
    %c0 = arith.constant 0 : index
    %c0_0 = arith.constant 0 : index
    %c0_1 = arith.constant 0 : index
    %0 = vector.load %arg2[%c0, %c0_0, %c0_1] : memref<1x4x326xbf16, #tpu.memory_space<vmem>>, vector<1x4x288xbf16>
    %1 = vector.shape_cast %0 : vector<1x4x288xbf16> to vector<4x288xbf16>
    %c0_2 = arith.constant 0 : index
    %c0_3 = arith.constant 0 : index
    %2 = vector.load %arg9[%c0_2, %c0_3] : memref<72x288xbf16, #tpu.memory_space<vmem>>, vector<4x288xbf16>
    tpu.vector_store %arg9[%c0_2, %c0_3], %1 {strides = array<i32>} : memref<72x288xbf16, #tpu.memory_space<vmem>>, vector<4x288xbf16>,
    %c0_4 = arith.constant 0 : index
    %c0_5 = arith.constant 0 : index
    %c1 = arith.constant 1 : index
    %3 = vector.load %arg2[%c0_4, %c0_5, %c1] : memref<1x4x326xbf16, #tpu.memory_space<vmem>>, vector<1x4x288xbf16>
    %4 = vector.shape_cast %3 : vector<1x4x288xbf16> to vector<4x288xbf16>
    %c4 = arith.constant 4 : index
    %c0_6 = arith.constant 0 : index
    %5 = vector.load %arg9[%c4, %c0_6] : memref<72x288xbf16, #tpu.memory_space<vmem>>, vector<4x288xbf16>
    tpu.vector_store %arg9[%c4, %c0_6], %4 {strides = array<i32>} : memref<72x288xbf16, #tpu.memory_space<vmem>>, vector<4x288xbf16>,
    %c0_7 = arith.constant 0 : index
    %c0_8 = arith.constant 0 : index
    %c2 = arith.constant 2 : index
    %6 = vector.load %arg2[%c0_7, %c0_8, %c2] : memref<1x4x326xbf16, #tpu.memory_space<vmem>>, vector<1x4x288xbf16>
    %7 = vector.shape_cast %6 : vector<1x4x288xbf16> to vector<4x288xbf16>
    %c8 = arith.constant 8 : index
    %c0_9 = arith.constant 0 : index
    %8 = vector.load %arg9[%c8, %c0_9] : memref<72x288xbf16, #tpu.memory_space<vmem>>, vector<4x288xbf16>
    tpu.vector_store %arg9[%c8, %c0_9], %7 {strides = array<i32>} : memref<72x288xbf16, #tpu.memory_space<vmem>>, vector<4x288xbf16>,
    %c0_10 = arith.constant 0 : index
    %c0_11 = arith.constant 0 : index
    %c18 = arith.constant 18 : index
    %9 = vector.load %arg2[%c0_10, %c0_11, %c18] : memref<1x4x326xbf16, #tpu.memory_space<vmem>>, vector<1x4x288xbf16>
    %10 = vector.shape_cast %9 : vector<1x4x288xbf16> to vector<4x288xbf16>
    %c12 = arith.constant 12 : index
    %c0_12 = arith.constant 0 : index
    %11 = vector.load %arg9[%c12, %c0_12] : memref<72x288xbf16, #tpu.memory_space<vmem>>, vector<4x288xbf16>
    tpu.vector_store %arg9[%c12, %c0_12], %10 {strides = array<i32>} : memref<72x288xbf16, #tpu.memory_space<vmem>>, vector<4x288xbf16>,
    %c0_13 = arith.constant 0 : index
    %c0_14 = arith.constant 0 : index
    %c19 = arith.constant 19 : index
    %12 = vector.load %arg2[%c0_13, %c0_14, %c19] : memref<1x4x326xbf16, #tpu.memory_space<vmem>>, vector<1x4x288xbf16>
    %13 = vector.shape_cast %12 : vector<1x4x288xbf16> to vector<4x288xbf16>
    %c16 = arith.constant 16 : index
    %c0_15 = arith.constant 0 : index
    %14 = vector.load %arg9[%c16, %c0_15] : memref<72x288xbf16, #tpu.memory_space<vmem>>, vector<4x288xbf16>
    tpu.vector_store %arg9[%c16, %c0_15], %13 {strides = array<i32>} : memref<72x288xbf16, #tpu.memory_space<vmem>>, vector<4x288xbf16>,
    %c0_16 = arith.constant 0 : index
    %c0_17 = arith.constant 0 : index
    %c20 = arith.constant 20 : index
    %15 = vector.load %arg2[%c0_16, %c0_17, %c20] : memref<1x4x326xbf16, #tpu.memory_space<vmem>>, vector<1x4x288xbf16>
    %16 = vector.shape_cast %15 : vector<1x4x288xbf16> to vector<4x288xbf16>
    %c20_18 = arith.constant 20 : index
    %c0_19 = arith.constant 0 : index
    %17 = vector.load %arg9[%c20_18, %c0_19] : memref<72x288xbf16, #tpu.memory_space<vmem>>, vector<4x288xbf16>
    tpu.vector_store %arg9[%c20_18, %c0_19], %16 {strides = array<i32>} : memref<72x288xbf16, #tpu.memory_space<vmem>>, vector<4x288xbf16>,
    %c0_20 = arith.constant 0 : index
    %c0_21 = arith.constant 0 : index
    %c36 = arith.constant 36 : index
    %18 = vector.load %arg2[%c0_20, %c0_21, %c36] : memref<1x4x326xbf16, #tpu.memory_space<vmem>>, vector<1x4x288xbf16>
    %19 = vector.shape_cast %18 : vector<1x4x288xbf16> to vector<4x288xbf16>
    %c24 = arith.constant 24 : index
    %c0_22 = arith.constant 0 : index
    %20 = vector.load %arg9[%c24, %c0_22] : memref<72x288xbf16, #tpu.memory_space<vmem>>, vector<4x288xbf16>
    tpu.vector_store %arg9[%c24, %c0_22], %19 {strides = array<i32>} : memref<72x288xbf16, #tpu.memory_space<vmem>>, vector<4x288xbf16>,
    %c0_23 = arith.constant 0 : index
    %c0_24 = arith.constant 0 : index
    %c37 = arith.constant 37 : index
    %21 = vector.load %arg2[%c0_23, %c0_24, %c37] : memref<1x4x326xbf16, #tpu.memory_space<vmem>>, vector<1x4x288xbf16>
    %22 = vector.shape_cast %21 : vector<1x4x288xbf16> to vector<4x288xbf16>
    %c28 = arith.constant 28 : index
    %c0_25 = arith.constant 0 : index
    %23 = vector.load %arg9[%c28, %c0_25] : memref<72x288xbf16, #tpu.memory_space<vmem>>, vector<4x288xbf16>
    tpu.vector_store %arg9[%c28, %c0_25], %22 {strides = array<i32>} : memref<72x288xbf16, #tpu.memory_space<vmem>>, vector<4x288xbf16>,
    %c0_26 = arith.constant 0 : index
    %c0_27 = arith.constant 0 : index
    %c38 = arith.constant 38 : index
    %24 = vector.load %arg2[%c0_26, %c0_27, %c38] : memref<1x4x326xbf16, #tpu.memory_space<vmem>>, vector<1x4x288xbf16>
    %25 = vector.shape_cast %24 : vector<1x4x288xbf16> to vector<4x288xbf16>
    %c32 = arith.constant 32 : index
    %c0_28 = arith.constant 0 : index
    %26 = vector.load %arg9[%c32, %c0_28] : memref<72x288xbf16, #tpu.memory_space<vmem>>, vector<4x288xbf16>
    tpu.vector_store %arg9[%c32, %c0_28], %25 {strides = array<i32>} : memref<72x288xbf16, #tpu.memory_space<vmem>>, vector<4x288xbf16>,
    %c0_29 = arith.constant 0 : index
    %c0_30 = arith.constant 0 : index
    %27 = vector.load %arg3[%c0_29, %c0_30] : memref<8x36xbf16, #tpu.memory_space<vmem>>, vector<8x36xbf16>
    %c0_31 = arith.constant 0 : index
    %c0_32 = arith.constant 0 : index
    %28 = vector.load %arg9[%c0_31, %c0_32] : memref<72x288xbf16, #tpu.memory_space<vmem>>, vector<36x288xbf16>
    %cst = arith.constant dense<0.000000e+00> : vector<8x288xf32>
    %29 = tpu.matmul %27, %28, %cst {dimension_numbers = #tpu.dot_dimension_numbers<[1], [0], [0], [1], [0, 0, 1, 1], [], []>} : vector<8x36xbf16>, vector<36x288xbf16>, vector<8x288xf32> -> vector<8x288xf32>
    %c0_33 = arith.constant 0 : index
    %c0_34 = arith.constant 0 : index
    %30 = vector.load %arg4[%c0_33, %c0_34] : memref<8x1xf32, #tpu.memory_space<vmem>>, vector<8x1xf32>
    %31 = vector.broadcast %30 : vector<8x1xf32> to vector<8x288xf32>
    %32 = arith.addf %29, %31 : vector<8x288xf32>
    %cst_35 = arith.constant 0.000000e+00 : f32
    %33 = vector.broadcast %cst_35 : f32 to vector<8x288xf32>
    %34 = arith.maximumf %32, %33 : vector<8x288xf32>
    %c0_36 = arith.constant 0 : index
    %c0_37 = arith.constant 0 : index
    %35 = vector.load %arg1[%c0_36, %c0_37] : memref<1x288xf32, #tpu.memory_space<vmem>>, vector<1x288xf32>
    %36 = vector.broadcast %35 : vector<1x288xf32> to vector<8x288xf32>
    %37 = arith.mulf %34, %36 : vector<8x288xf32>
    %cst_38 = arith.constant 0.000000e+00 : bf16
    %38 = vector.broadcast %cst_38 : bf16 to vector<8x19xbf16>
    %c0_39 = arith.constant 0 : index
    %c0_40 = arith.constant 0 : index
    %39 = vector.load %arg8[%c0_39, %c0_40] : memref<8x326xbf16, #tpu.memory_space<vmem>>, vector<8x19xbf16>
    tpu.vector_store %arg8[%c0_39, %c0_40], %38 {strides = array<i32>} : memref<8x326xbf16, #tpu.memory_space<vmem>>, vector<8x19xbf16>,
    %c0_41 = arith.constant 0 : index
    %c307 = arith.constant 307 : index
    %40 = vector.load %arg8[%c0_41, %c307] : memref<8x326xbf16, #tpu.memory_space<vmem>>, vector<8x19xbf16>
    tpu.vector_store %arg8[%c0_41, %c307], %38 {strides = array<i32>} : memref<8x326xbf16, #tpu.memory_space<vmem>>, vector<8x19xbf16>,
    %41 = arith.truncf %37 : vector<8x288xf32> to vector<8x288xbf16>
    %c0_42 = arith.constant 0 : index
    %c19_43 = arith.constant 19 : index
    %42 = vector.load %arg8[%c0_42, %c19_43] : memref<8x326xbf16, #tpu.memory_space<vmem>>, vector<8x288xbf16>
    tpu.vector_store %arg8[%c0_42, %c19_43], %41 {strides = array<i32>} : memref<8x326xbf16, #tpu.memory_space<vmem>>, vector<8x288xbf16>,
    %c0_44 = arith.constant 0 : index
    %c0_45 = arith.constant 0 : index
    %43 = vector.load %arg8[%c0_44, %c0_45] : memref<8x326xbf16, #tpu.memory_space<vmem>>, vector<8x288xbf16>
    %c0_46 = arith.constant 0 : index
    %c0_47 = arith.constant 0 : index
    %44 = vector.load %arg9[%c0_46, %c0_47] : memref<72x288xbf16, #tpu.memory_space<vmem>>, vector<8x288xbf16>
    tpu.vector_store %arg9[%c0_46, %c0_47], %43 {strides = array<i32>} : memref<72x288xbf16, #tpu.memory_space<vmem>>, vector<8x288xbf16>,
    %c0_48 = arith.constant 0 : index
    %c1_49 = arith.constant 1 : index
    %45 = vector.load %arg8[%c0_48, %c1_49] : memref<8x326xbf16, #tpu.memory_space<vmem>>, vector<8x288xbf16>
    %c8_50 = arith.constant 8 : index
    %c0_51 = arith.constant 0 : index
    %46 = vector.load %arg9[%c8_50, %c0_51] : memref<72x288xbf16, #tpu.memory_space<vmem>>, vector<8x288xbf16>
    tpu.vector_store %arg9[%c8_50, %c0_51], %45 {strides = array<i32>} : memref<72x288xbf16, #tpu.memory_space<vmem>>, vector<8x288xbf16>,
    %c0_52 = arith.constant 0 : index
    %c2_53 = arith.constant 2 : index
    %47 = vector.load %arg8[%c0_52, %c2_53] : memref<8x326xbf16, #tpu.memory_space<vmem>>, vector<8x288xbf16>
    %c16_54 = arith.constant 16 : index
    %c0_55 = arith.constant 0 : index
    %48 = vector.load %arg9[%c16_54, %c0_55] : memref<72x288xbf16, #tpu.memory_space<vmem>>, vector<8x288xbf16>
    tpu.vector_store %arg9[%c16_54, %c0_55], %47 {strides = array<i32>} : memref<72x288xbf16, #tpu.memory_space<vmem>>, vector<8x288xbf16>,
    %c0_56 = arith.constant 0 : index
    %c18_57 = arith.constant 18 : index
    %49 = vector.load %arg8[%c0_56, %c18_57] : memref<8x326xbf16, #tpu.memory_space<vmem>>, vector<8x288xbf16>
    %c24_58 = arith.constant 24 : index
    %c0_59 = arith.constant 0 : index
    %50 = vector.load %arg9[%c24_58, %c0_59] : memref<72x288xbf16, #tpu.memory_space<vmem>>, vector<8x288xbf16>
    tpu.vector_store %arg9[%c24_58, %c0_59], %49 {strides = array<i32>} : memref<72x288xbf16, #tpu.memory_space<vmem>>, vector<8x288xbf16>,
    %c0_60 = arith.constant 0 : index
    %c19_61 = arith.constant 19 : index
    %51 = vector.load %arg8[%c0_60, %c19_61] : memref<8x326xbf16, #tpu.memory_space<vmem>>, vector<8x288xbf16>
    %c32_62 = arith.constant 32 : index
    %c0_63 = arith.constant 0 : index
    %52 = vector.load %arg9[%c32_62, %c0_63] : memref<72x288xbf16, #tpu.memory_space<vmem>>, vector<8x288xbf16>
    tpu.vector_store %arg9[%c32_62, %c0_63], %51 {strides = array<i32>} : memref<72x288xbf16, #tpu.memory_space<vmem>>, vector<8x288xbf16>,
    %c0_64 = arith.constant 0 : index
    %c20_65 = arith.constant 20 : index
    %53 = vector.load %arg8[%c0_64, %c20_65] : memref<8x326xbf16, #tpu.memory_space<vmem>>, vector<8x288xbf16>
    %c40 = arith.constant 40 : index
    %c0_66 = arith.constant 0 : index
    %54 = vector.load %arg9[%c40, %c0_66] : memref<72x288xbf16, #tpu.memory_space<vmem>>, vector<8x288xbf16>
    tpu.vector_store %arg9[%c40, %c0_66], %53 {strides = array<i32>} : memref<72x288xbf16, #tpu.memory_space<vmem>>, vector<8x288xbf16>,
    %c0_67 = arith.constant 0 : index
    %c36_68 = arith.constant 36 : index
    %55 = vector.load %arg8[%c0_67, %c36_68] : memref<8x326xbf16, #tpu.memory_space<vmem>>, vector<8x288xbf16>
    %c48 = arith.constant 48 : index
    %c0_69 = arith.constant 0 : index
    %56 = vector.load %arg9[%c48, %c0_69] : memref<72x288xbf16, #tpu.memory_space<vmem>>, vector<8x288xbf16>
    tpu.vector_store %arg9[%c48, %c0_69], %55 {strides = array<i32>} : memref<72x288xbf16, #tpu.memory_space<vmem>>, vector<8x288xbf16>,
    %c0_70 = arith.constant 0 : index
    %c37_71 = arith.constant 37 : index
    %57 = vector.load %arg8[%c0_70, %c37_71] : memref<8x326xbf16, #tpu.memory_space<vmem>>, vector<8x288xbf16>
    %c56 = arith.constant 56 : index
    %c0_72 = arith.constant 0 : index
    %58 = vector.load %arg9[%c56, %c0_72] : memref<72x288xbf16, #tpu.memory_space<vmem>>, vector<8x288xbf16>
    tpu.vector_store %arg9[%c56, %c0_72], %57 {strides = array<i32>} : memref<72x288xbf16, #tpu.memory_space<vmem>>, vector<8x288xbf16>,
    %c0_73 = arith.constant 0 : index
    %c38_74 = arith.constant 38 : index
    %59 = vector.load %arg8[%c0_73, %c38_74] : memref<8x326xbf16, #tpu.memory_space<vmem>>, vector<8x288xbf16>
    %c64 = arith.constant 64 : index
    %c0_75 = arith.constant 0 : index
    %60 = vector.load %arg9[%c64, %c0_75] : memref<72x288xbf16, #tpu.memory_space<vmem>>, vector<8x288xbf16>
    tpu.vector_store %arg9[%c64, %c0_75], %59 {strides = array<i32>} : memref<72x288xbf16, #tpu.memory_space<vmem>>, vector<8x288xbf16>,
    %c0_76 = arith.constant 0 : index
    %c0_77 = arith.constant 0 : index
    %61 = vector.load %arg5[%c0_76, %c0_77] : memref<8x72xbf16, #tpu.memory_space<vmem>>, vector<8x72xbf16>
    %c0_78 = arith.constant 0 : index
    %c0_79 = arith.constant 0 : index
    %62 = vector.load %arg9[%c0_78, %c0_79] : memref<72x288xbf16, #tpu.memory_space<vmem>>, vector<72x288xbf16>
    %cst_80 = arith.constant dense<0.000000e+00> : vector<8x288xf32>
    %63 = tpu.matmul %61, %62, %cst_80 {dimension_numbers = #tpu.dot_dimension_numbers<[1], [0], [0], [1], [0, 0, 1, 1], [], []>} : vector<8x72xbf16>, vector<72x288xbf16>, vector<8x288xf32> -> vector<8x288xf32>
    %c0_81 = arith.constant 0 : index
    %c0_82 = arith.constant 0 : index
    %64 = vector.load %arg6[%c0_81, %c0_82] : memref<8x1xf32, #tpu.memory_space<vmem>>, vector<8x1xf32>
    %65 = vector.broadcast %64 : vector<8x1xf32> to vector<8x288xf32>
    %66 = arith.addf %63, %65 : vector<8x288xf32>
    %cst_83 = arith.constant 0.000000e+00 : f32
    %67 = vector.broadcast %cst_83 : f32 to vector<8x288xf32>
    %68 = arith.maximumf %66, %67 : vector<8x288xf32>
    %69 = vector.shape_cast %68 : vector<8x288xf32> to vector<8x16x18xf32>
    %70 = vector.extract_strided_slice %69 {offsets = [0, 0, 1], sizes = [8, 16, 16], strides = [1, 1, 1]} : vector<8x16x18xf32> to vector<8x16x16xf32>
    %71 = arith.truncf %70 : vector<8x16x16xf32> to vector<8x16x16xbf16>
    %c0_84 = arith.constant 0 : index
    %c0_85 = arith.constant 0 : index
    %c0_86 = arith.constant 0 : index
    %c0_87 = arith.constant 0 : index
    %72 = vector.load %arg7[%c0_84, %c0_85, %c0_86, %c0_87] : memref<1x8x16x16xbf16, #tpu.memory_space<vmem>>, vector<1x8x16x16xbf16>
    %73 = vector.shape_cast %72 : vector<1x8x16x16xbf16> to vector<8x16x16xbf16>
    %74 = vector.shape_cast %71 : vector<8x16x16xbf16> to vector<1x8x16x16xbf16>
    tpu.vector_store %arg7[%c0_84, %c0_85, %c0_86, %c0_87], %74 {strides = array<i32>} : memref<1x8x16x16xbf16, #tpu.memory_space<vmem>>, vector<1x8x16x16xbf16>,
    return
  }
  func.func @transform_0(%arg0: i32) -> (i32, i32) {
    %c0_i32 = arith.constant 0 : i32
    %c0_i32_0 = arith.constant 0 : i32
    %c0_i32_1 = arith.constant 0 : i32
    return %c0_i32, %c0_i32_0 : i32, i32
  }
  func.func @transform_1(%arg0: i32) -> (i32, i32, i32) {
    %c0_i32 = arith.constant 0 : i32
    %c0_i32_0 = arith.constant 0 : i32
    %c0_i32_1 = arith.constant 0 : i32
    return %arg0, %c0_i32, %c0_i32_0 : i32, i32, i32
  }
  func.func @transform_2(%arg0: i32) -> (i32, i32) {
    %c0_i32 = arith.constant 0 : i32
    %c0_i32_0 = arith.constant 0 : i32
    %c0_i32_1 = arith.constant 0 : i32
    return %c0_i32, %c0_i32_0 : i32, i32
  }
  func.func @transform_3(%arg0: i32) -> (i32, i32) {
    %c0_i32 = arith.constant 0 : i32
    %c0_i32_0 = arith.constant 0 : i32
    %c0_i32_1 = arith.constant 0 : i32
    return %c0_i32, %c0_i32_0 : i32, i32
  }
  func.func @transform_4(%arg0: i32) -> (i32, i32) {
    %c0_i32 = arith.constant 0 : i32
    %c0_i32_0 = arith.constant 0 : i32
    %c0_i32_1 = arith.constant 0 : i32
    return %c0_i32, %c0_i32_0 : i32, i32
  }
  func.func @transform_5(%arg0: i32) -> (i32, i32) {
    %c0_i32 = arith.constant 0 : i32
    %c0_i32_0 = arith.constant 0 : i32
    %c0_i32_1 = arith.constant 0 : i32
    return %c0_i32, %c0_i32_0 : i32, i32
  }
  func.func @transform_6(%arg0: i32) -> (i32, i32, i32, i32) {
    %c0_i32 = arith.constant 0 : i32
    %c0_i32_0 = arith.constant 0 : i32
    %c0_i32_1 = arith.constant 0 : i32
    %c0_i32_2 = arith.constant 0 : i32
    return %arg0, %c0_i32, %c0_i32_0, %c0_i32_1 : i32, i32, i32, i32
  }
}

</mosaic_0001>

<llo_original>
// kernel: decoder_module_forward.1
$region0: #{decoder_module_forward.1}
  #allocation0 [shape = 'u32[]', space=smem, size = 0x4, offset = 0x4, fixed_abs, tag = 'smem constant byte address 0x4 - core index']
  #allocation1 [shape = 'u32[144,128]{1,0:T(1,128)}', space=vmem, size = 0x12000, scoped, tag = 'internal scratch']
  #allocation2 [shape = 'bf16[8,326]{1,0:T(8,128)(2,1)}', space=vmem, size = 0x1800, scoped, tag = 'scratch operand']
  #allocation3 [shape = 'bf16[72,288]{1,0:T(8,128)(2,1)}', space=vmem, size = 0xd800, scoped, tag = 'scratch operand']
  %s0 = inlined_call_operand.vmem [shape: f32[1,288], index: 0, kind: input, shape index: {}]
  %s1 = inlined_call_operand.vmem [shape: bf16[2,4,326], index: 1, kind: input, shape index: {}]
  %s2 = inlined_call_operand.vmem [shape: bf16[8,36], index: 2, kind: input, shape index: {}]
  %s3 = inlined_call_operand.vmem [shape: f32[8,1], index: 3, kind: input, shape index: {}]
  %s4 = inlined_call_operand.vmem [shape: bf16[8,72], index: 4, kind: input, shape index: {}]
  %s5 = inlined_call_operand.vmem [shape: f32[8,1], index: 5, kind: input, shape index: {}]
  %s6 = inlined_call_operand.hbm [shape: bf16[2,8,16,16], index: 6, kind: output, shape index: {}]
  %s7 = sld [smem:[#allocation0]]
  $region57: #{decoder_module_forward.1} parent=0
    _
  %s9 = ssub.s32 1, %s7
  %s10 = scalar_select 0, %s9, %s7
  $region1: #{decoder_module_forward.1} parent=0
    #allocation4 [shape = 'u8[65536]{0}', space=vmem, size = 0x10000, scoped, tag = 'output window, operand 0']
    #allocation5 [shape = 's32[2]{0}', space=sflag, size = 0x8, scoped, tag = 'scoped memory for decoder_module_forward.1']
    %11 = vsyncpa [#allocation5], 0
    %s12 = scalar_lea.sflag [#allocation5], 1
    %13 = vsyncpa %s12, 0
    loop: start=0, step=1, limit=4
    $region2: #{decoder_module_forward.1} parent=1 // loop_pre_header
      _
    $region3: #{decoder_module_forward.1} parent=1 // loop_header
      %s15 = sphi 0, %s19
      %p16 = scmp.ge.s32.totalorder %s15, 4
      %s23 = sphi 0, %s23
      %s25 = sphi 0, %s23
      %s26 = sphi 0, %s25
      %s40 = sphi 0, %s26
      %s46 = sphi 0, %s48
      %s49 = sphi 0, %s46
      %s50 = sphi 0, %s49
      %s66 = sphi 0, %s50
      %s70 = sphi 0, %s70
      %s72 = sphi 0, %s70
      %s73 = sphi 0, %s72
      %s87 = sphi 0, %s73
      %s91 = sphi 0, %s91
      %s93 = sphi 0, %s91
      %s94 = sphi 0, %s93
      %s108 = sphi 0, %s94
      %s112 = sphi 0, %s112
      %s114 = sphi 0, %s112
      %s115 = sphi 0, %s114
      %s129 = sphi 0, %s115
      %s133 = sphi 0, %s133
      %s135 = sphi 0, %s133
      %s136 = sphi 0, %s135
      %s150 = sphi 0, %s136
      %s156 = sphi 0, %s158
      %s159 = sphi 0, %s156
      %s160 = sphi 0, %s159
      %s176 = sphi 0, %s160
    $region4: #{decoder_module_forward.1} parent=1 // loop_header_branch
      %18 = sbr.rel (%p16) target = $region8
    $region5: #{decoder_module_forward.1} parent=1 // loop_body
      %s20 = ssub.s32 %s15, 1
      %s21 = ssub.s32 %s15, 2
      %s22 = sadd.s32 %s15, 1
      %s24 = sadd.s32 %s23, 1
      %p27 = scmp.eq.s32.totalorder %s15, 1
      %p28 = scmp.ne.s32.totalorder %s23, %s25
      %p29 = scmp.eq.s32.totalorder %s15, 0
      %p30 = por %p28, %p29
      %p31 = scmp.ne.s32.totalorder %s23, %s25
      %p32 = scmp.eq.s32.totalorder %s20, 1
      %p33 = por %p31, %p32
      %p34 = scmp.ne.s32.totalorder %s25, %s26
      %p35 = scmp.eq.s32.totalorder %s20, 0
      %p36 = por %p34, %p35
      %p37 = scmp.ne.s32.totalorder %s25, %s26
      %p38 = scmp.eq.s32.totalorder %s21, 1
      %p39 = por %p37, %p38
      %p41 = scmp.ne.s32.totalorder %s26, %s40
      %p42 = scmp.eq.s32.totalorder %s21, 0
      %p43 = por %p41, %p42
      %s44 = ssub.s32 %s15, %s22
      %p45 = scmp.eq.s32.totalorder %s44, 0
      %s47 = sadd.s32 %s46, 1
      %s48 = scalar_select %p45, %s46, %s47
      %p51 = pneg %p45
      %p52 = scmp.eq.s32.totalorder %s15, 1
      %p53 = por %p51, %p52
      %p54 = scmp.ne.s32.totalorder %s46, %s49
      %p55 = scmp.eq.s32.totalorder %s15, 0
      %p56 = por %p54, %p55
      %p57 = scmp.ne.s32.totalorder %s46, %s49
      %p58 = scmp.eq.s32.totalorder %s20, 1
      %p59 = por %p57, %p58
      %p60 = scmp.ne.s32.totalorder %s49, %s50
      %p61 = scmp.eq.s32.totalorder %s20, 0
      %p62 = por %p60, %p61
      %p63 = scmp.ne.s32.totalorder %s49, %s50
      %p64 = scmp.eq.s32.totalorder %s21, 1
      %p65 = por %p63, %p64
      %p67 = scmp.ne.s32.totalorder %s50, %s66
      %p68 = scmp.eq.s32.totalorder %s21, 0
      %p69 = por %p67, %p68
      %s71 = sadd.s32 %s70, 1
      %p74 = scmp.eq.s32.totalorder %s15, 1
      %p75 = scmp.ne.s32.totalorder %s70, %s72
      %p76 = scmp.eq.s32.totalorder %s15, 0
      %p77 = por %p75, %p76
      %p78 = scmp.ne.s32.totalorder %s70, %s72
      %p79 = scmp.eq.s32.totalorder %s20, 1
      %p80 = por %p78, %p79
      %p81 = scmp.ne.s32.totalorder %s72, %s73
      %p82 = scmp.eq.s32.totalorder %s20, 0
      %p83 = por %p81, %p82
      %p84 = scmp.ne.s32.totalorder %s72, %s73
      %p85 = scmp.eq.s32.totalorder %s21, 1
      %p86 = por %p84, %p85
      %p88 = scmp.ne.s32.totalorder %s73, %s87
      %p89 = scmp.eq.s32.totalorder %s21, 0
      %p90 = por %p88, %p89
      %s92 = sadd.s32 %s91, 1
      %p95 = scmp.eq.s32.totalorder %s15, 1
      %p96 = scmp.ne.s32.totalorder %s91, %s93
      %p97 = scmp.eq.s32.totalorder %s15, 0
      %p98 = por %p96, %p97
      %p99 = scmp.ne.s32.totalorder %s91, %s93
      %p100 = scmp.eq.s32.totalorder %s20, 1
      %p101 = por %p99, %p100
      %p102 = scmp.ne.s32.totalorder %s93, %s94
      %p103 = scmp.eq.s32.totalorder %s20, 0
      %p104 = por %p102, %p103
      %p105 = scmp.ne.s32.totalorder %s93, %s94
      %p106 = scmp.eq.s32.totalorder %s21, 1
      %p107 = por %p105, %p106
      %p109 = scmp.ne.s32.totalorder %s94, %s108
      %p110 = scmp.eq.s32.totalorder %s21, 0
      %p111 = por %p109, %p110
      %s113 = sadd.s32 %s112, 1
      %p116 = scmp.eq.s32.totalorder %s15, 1
      %p117 = scmp.ne.s32.totalorder %s112, %s114
      %p118 = scmp.eq.s32.totalorder %s15, 0
      %p119 = por %p117, %p118
      %p120 = scmp.ne.s32.totalorder %s112, %s114
      %p121 = scmp.eq.s32.totalorder %s20, 1
      %p122 = por %p120, %p121
      %p123 = scmp.ne.s32.totalorder %s114, %s115
      %p124 = scmp.eq.s32.totalorder %s20, 0
      %p125 = por %p123, %p124
      %p126 = scmp.ne.s32.totalorder %s114, %s115
      %p127 = scmp.eq.s32.totalorder %s21, 1
      %p128 = por %p126, %p127
      %p130 = scmp.ne.s32.totalorder %s115, %s129
      %p131 = scmp.eq.s32.totalorder %s21, 0
      %p132 = por %p130, %p131
      %s134 = sadd.s32 %s133, 1
      %p137 = scmp.eq.s32.totalorder %s15, 1
      %p138 = scmp.ne.s32.totalorder %s133, %s135
      %p139 = scmp.eq.s32.totalorder %s15, 0
      %p140 = por %p138, %p139
      %p141 = scmp.ne.s32.totalorder %s133, %s135
      %p142 = scmp.eq.s32.totalorder %s20, 1
      %p143 = por %p141, %p142
      %p144 = scmp.ne.s32.totalorder %s135, %s136
      %p145 = scmp.eq.s32.totalorder %s20, 0
      %p146 = por %p144, %p145
      %p147 = scmp.ne.s32.totalorder %s135, %s136
      %p148 = scmp.eq.s32.totalorder %s21, 1
      %p149 = por %p147, %p148
      %p151 = scmp.ne.s32.totalorder %s136, %s150
      %p152 = scmp.eq.s32.totalorder %s21, 0
      %p153 = por %p151, %p152
      %s154 = ssub.s32 %s15, %s22
      %p155 = scmp.eq.s32.totalorder %s154, 0
      %s157 = sadd.s32 %s156, 1
      %s158 = scalar_select %p155, %s156, %s157
      %p161 = pneg %p155
      %p162 = scmp.eq.s32.totalorder %s15, 1
      %p163 = por %p161, %p162
      %p164 = scmp.ne.s32.totalorder %s156, %s159
      %p165 = scmp.eq.s32.totalorder %s15, 0
      %p166 = por %p164, %p165
      %p167 = scmp.ne.s32.totalorder %s156, %s159
      %p168 = scmp.eq.s32.totalorder %s20, 1
      %p169 = por %p167, %p168
      %p170 = scmp.ne.s32.totalorder %s159, %s160
      %p171 = scmp.eq.s32.totalorder %s20, 0
      %p172 = por %p170, %p171
      %p173 = scmp.ne.s32.totalorder %s159, %s160
      %p174 = scmp.eq.s32.totalorder %s21, 1
      %p175 = por %p173, %p174
      %p177 = scmp.ne.s32.totalorder %s160, %s176
      %p178 = scmp.eq.s32.totalorder %s21, 0
      %p179 = por %p177, %p178
      %p180 = scmp.le.s32.totalorder 1, %s15
      %p181 = scmp.lt.s32.totalorder %s15, 3
      %p182 = pnand %p180, %p181
      %p183 = pneg %p182
      // Predicated region
      $region9: #{decoder_module_forward.1} parent=5 // pred_check
        _
      $region10: #{decoder_module_forward.1} parent=5 // pred_check_branch
        %185 = sbr.rel (%p182) target = $region12
      $region11: #{decoder_module_forward.1} parent=5 // pred_region
        %s186 = ssub.s32 %s15, 1
        // Predicated region
        $region13: #{decoder_module_forward.1} parent=11 // pred_check
          %p187 = pneg %p36
        $region14: #{decoder_module_forward.1} parent=11 // pred_check_branch
          %189 = sbr.rel (%p187) target = $region16
        $region15: #{decoder_module_forward.1} parent=11 // pred_region
          _
        $region16: #{decoder_module_forward.1} parent=11 // pred_fallthru
          _
        // Predicated region
        $region17: #{decoder_module_forward.1} parent=11 // pred_check
          %p190 = pneg %p83
        $region18: #{decoder_module_forward.1} parent=11 // pred_check_branch
          %192 = sbr.rel (%p190) target = $region20
        $region19: #{decoder_module_forward.1} parent=11 // pred_region
          _
        $region20: #{decoder_module_forward.1} parent=11 // pred_fallthru
          _
        // Predicated region
        $region21: #{decoder_module_forward.1} parent=11 // pred_check
          %p193 = pneg %p104
        $region22: #{decoder_module_forward.1} parent=11 // pred_check_branch
          %195 = sbr.rel (%p193) target = $region24
        $region23: #{decoder_module_forward.1} parent=11 // pred_region
          _
        $region24: #{decoder_module_forward.1} parent=11 // pred_fallthru
          _
        // Predicated region
        $region25: #{decoder_module_forward.1} parent=11 // pred_check
          %p196 = pneg %p125
        $region26: #{decoder_module_forward.1} parent=11 // pred_check_branch
          %198 = sbr.rel (%p196) target = $region28
        $region27: #{decoder_module_forward.1} parent=11 // pred_region
          _
        $region28: #{decoder_module_forward.1} parent=11 // pred_fallthru
          _
        // Predicated region
        $region29: #{decoder_module_forward.1} parent=11 // pred_check
          %p199 = pneg %p146
        $region30: #{decoder_module_forward.1} parent=11 // pred_check_branch
          %201 = sbr.rel (%p199) target = $region32
        $region31: #{decoder_module_forward.1} parent=11 // pred_region
          _
        $region32: #{decoder_module_forward.1} parent=11 // pred_fallthru
          _
      $region12: #{decoder_module_forward.1} parent=5 // pred_fallthru
        _
      %p202 = scmp.lt.s32.totalorder %s15, 2
      // Predicated region
      $region33: #{decoder_module_forward.1} parent=5 // pred_check
        %p203 = pneg %p202
      $region34: #{decoder_module_forward.1} parent=5 // pred_check_branch
        %205 = sbr.rel (%p203) target = $region36
      $region35: #{decoder_module_forward.1} parent=5 // pred_region
        // Predicated region
        $region37: #{decoder_module_forward.1} parent=35 // pred_check
          %p206 = pneg %p56
        $region38: #{decoder_module_forward.1} parent=35 // pred_check_branch
          %208 = sbr.rel (%p206) target = $region40
        $region39: #{decoder_module_forward.1} parent=35 // pred_region
          %p209 = scmp.lt.s32.totalorder %s15, 1
          %s210 = scalar_select %p209, %s15, 1
          %s211 = smul.addr %s210, 3
          %s212 = smul.addr %s211, 2
          %s213 = scalar_lea.vmem %s1, %s212
        $region40: #{decoder_module_forward.1} parent=35 // pred_fallthru
          _
      $region36: #{decoder_module_forward.1} parent=5 // pred_fallthru
        _
      %p214 = scmp.le.s32.totalorder 1, %s15
      %p215 = scmp.lt.s32.totalorder %s15, 3
      %p216 = pnand %p214, %p215
      %p217 = pneg %p216
      // Predicated region
      $region41: #{decoder_module_forward.1} parent=5 // pred_check
        _
      $region42: #{decoder_module_forward.1} parent=5 // pred_check_branch
        %219 = sbr.rel (%p216) target = $region44
      $region43: #{decoder_module_forward.1} parent=5 // pred_region
        %s220 = ssub.s32 %s15, 1
        %p221 = pneg %p36
        %p222 = pneg %p33
        %p223 = scmp.lt.s32.totalorder %s20, 1
        %s224 = scalar_select %p223, %s20, 1
        %s225 = smul.addr %s224, 3
        %s226 = smul.addr %s225, 2
        %s227 = scalar_lea.vmem %s1, %s226
        %p228 = pneg %p62
        %p229 = pneg %p59
        %p230 = pneg %p83
        %p231 = pneg %p80
        %p232 = pneg %p104
        %p233 = pneg %p101
        %p234 = pneg %p125
        %p235 = pneg %p122
        %p236 = pneg %p146
        %p237 = pneg %p143
        %p238 = pneg %p172
        %p239 = pneg %p169
        %s240 = sand.u32 %s159, 1
        %s241 = scalar_lea.sflag [#allocation5], %s240
        %s242 = sand.u32 %s159, 1
        %s243 = smul.addr %s242, 64
        %s244 = scalar_lea.vmem [#allocation4], %s243
        %p245 = scmp.lt.s32.totalorder %s20, 1
        %s246 = scalar_select %p245, %s20, 1
        %s247 = smul.addr %s246, 3
        %s248 = smul.addr %s247, 2
        %s249 = scalar_lea.vmem %s1, %s248
        %v251 = vld [vmem:[%s249] sm:$0x3f]
        %v253 = vcombine.high %v251, %v251
        %v255 = vunpack.c.l.s4 1983009808
        %v256 = vunpack.c.0.s8 %v255
        %v257 = vlaneseq
        %v258 = vshrl.u32 %v257, 7
        %v259 = vsub.s32 %v256, %v258
        %v260 = vrot.slane %v251, %v259
        %v262 = vunpack.c.l.s4 1983009808
        %v263 = vunpack.c.0.s8 %v262
        %v264 = vlaneseq
        %v265 = vshrl.u32 %v264, 7
        %v266 = vsub.s32 %v263, %v265
        %v267 = vrot.slane %v253, %v266
        %270 = vst [vmem:[#allocation3] sm:$0x33] %v260
        %vm271 = vcmask 254976
        %272 = vst.msk [vmem:[#allocation3 + $0x8] sm:$0x3] %vm271, %v267
        %v273 = vld [vmem:[%s249] sm:$0x3f]
        %v275 = vcombine.low %v273, %v273
        %v277 = vunpack.c.l.s4 1983009808
        %v278 = vunpack.c.0.s8 %v277
        %v279 = vlaneseq
        %v280 = vshrl.u32 %v279, 7
        %v281 = vsub.s32 %v278, %v280
        %v282 = vrot.slane %v275, %v281
        %v284 = vunpack.c.l.s4 1983009808
        %v285 = vunpack.c.0.s8 %v284
        %v286 = vlaneseq
        %v287 = vshrl.u32 %v286, 7
        %v288 = vsub.s32 %v285, %v287
        %v289 = vrot.slane %v273, %v288
        %290 = vrot.lane.b32.xlu0 %v282, 127
        %v291 = vpop.permute.xlu0 %290
        %292 = vrot.lane.b32.xlu0 %v289, 127
        %v293 = vpop.permute.xlu0 %292
        %v294 = vrot.slane %v291, 4
        %v295 = vrot.slane %v293, 4
        %vm296 = vcmask 1043456
        %v297 = vsel %vm296, %v294, %v295
        %vm298 = vcmask 1039360
        %v299 = vsel %vm298, %v291, %v297
        %302 = vst [vmem:[#allocation3] sm:$0xcc] %v299
        %vm303 = vcmask 257026
        %304 = vst.msk [vmem:[#allocation3 + $0x8] sm:$0xc] %vm303, %v293
        %v305 = vld [vmem:[%s249] sm:$0x3f]
        %v307 = vcombine.high %v305, %v305
        %v309 = vunpack.c.l.s4 1983009808
        %v310 = vunpack.c.0.s8 %v309
        %v311 = vlaneseq
        %v312 = vshrl.u32 %v311, 7
        %v313 = vsub.s32 %v310, %v312
        %v314 = vrot.slane %v305, %v313
        %v316 = vunpack.c.l.s4 1983009808
        %v317 = vunpack.c.0.s8 %v316
        %v318 = vlaneseq
        %v319 = vshrl.u32 %v318, 7
        %v320 = vsub.s32 %v317, %v319
        %v321 = vrot.slane %v307, %v320
        %322 = vrot.lane.b32.xlu0 %v314, 126
        %v323 = vpop.permute.xlu0 %322
        %324 = vrot.lane.b32.xlu0 %v321, 126
        %v325 = vpop.permute.xlu0 %324
        %v326 = vrot.slane %v323, 4
        %v327 = vrot.slane %v325, 4
        %v328 = vsel %vm296, %v326, %v327
        %vm329 = vcmask 1031168
        %v330 = vsel %vm329, %v323, %v328
        %333 = vst [vmem:[#allocation3 + $0xc] sm:$0x33] %v330
        %334 = vst.msk [vmem:[#allocation3 + $0x14] sm:$0x3] %vm271, %v325
        %v335 = vld [vmem:[%s249] sm:$0x3f]
        %v337 = vcombine.low %v335, %v335
        %v339 = vunpack.c.l.s4 1983009808
        %v340 = vunpack.c.0.s8 %v339
        %v341 = vlaneseq
        %v342 = vshrl.u32 %v341, 7
        %v343 = vsub.s32 %v340, %v342
        %v344 = vrot.slane %v337, %v343
        %v346 = vunpack.c.l.s4 1983009808
        %v347 = vunpack.c.0.s8 %v346
        %v348 = vlaneseq
        %v349 = vshrl.u32 %v348, 7
        %v350 = vsub.s32 %v347, %v349
        %v351 = vrot.slane %v335, %v350
        %352 = vrot.lane.b32.xlu0 %v344, 110
        %v353 = vpop.permute.xlu0 %352
        %354 = vrot.lane.b32.xlu0 %v351, 110
        %v355 = vpop.permute.xlu0 %354
        %v356 = vrot.slane %v353, 4
        %v357 = vrot.slane %v355, 4
        %v358 = vsel %vm296, %v356, %v357
        %vm359 = vcmask 900096
        %v360 = vsel %vm359, %v353, %v358
        %363 = vst [vmem:[#allocation3 + $0xc] sm:$0xcc] %v360
        %364 = vst.msk [vmem:[#allocation3 + $0x14] sm:$0xc] %vm303, %v355
        %v365 = vld [vmem:[%s249] sm:$0x3f]
        %v367 = vcombine.high %v365, %v365
        %v369 = vunpack.c.l.s4 1983009808
        %v370 = vunpack.c.0.s8 %v369
        %v371 = vlaneseq
        %v372 = vshrl.u32 %v371, 7
        %v373 = vsub.s32 %v370, %v372
        %v374 = vrot.slane %v365, %v373
        %v376 = vunpack.c.l.s4 1983009808
        %v377 = vunpack.c.0.s8 %v376
        %v378 = vlaneseq
        %v379 = vshrl.u32 %v378, 7
        %v380 = vsub.s32 %v377, %v379
        %v381 = vrot.slane %v367, %v380
        %382 = vrot.lane.b32.xlu0 %v374, 109
        %v383 = vpop.permute.xlu0 %382
        %384 = vrot.lane.b32.xlu0 %v381, 109
        %v385 = vpop.permute.xlu0 %384
        %v386 = vrot.slane %v383, 4
        %v387 = vrot.slane %v385, 4
        %v388 = vsel %vm296, %v386, %v387
        %vm389 = vcmask 891904
        %v390 = vsel %vm389, %v383, %v388
        %393 = vst [vmem:[#allocation3 + $0x18] sm:$0x33] %v390
        %394 = vst.msk [vmem:[#allocation3 + $0x20] sm:$0x3] %vm271, %v385
        %v395 = vld [vmem:[%s249] sm:$0x3f]
        %v397 = vcombine.low %v395, %v395
        %v399 = vunpack.c.l.s4 1983009808
        %v400 = vunpack.c.0.s8 %v399
        %v401 = vlaneseq
        %v402 = vshrl.u32 %v401, 7
        %v403 = vsub.s32 %v400, %v402
        %v404 = vrot.slane %v397, %v403
        %v406 = vunpack.c.l.s4 1983009808
        %v407 = vunpack.c.0.s8 %v406
        %v408 = vlaneseq
        %v409 = vshrl.u32 %v408, 7
        %v410 = vsub.s32 %v407, %v409
        %v411 = vrot.slane %v395, %v410
        %412 = vrot.lane.b32.xlu0 %v404, 108
        %v413 = vpop.permute.xlu0 %412
        %414 = vrot.lane.b32.xlu0 %v411, 108
        %v415 = vpop.permute.xlu0 %414
        %v416 = vrot.slane %v413, 4
        %v417 = vrot.slane %v415, 4
        %v418 = vsel %vm296, %v416, %v417
        %vm419 = vcmask 883712
        %v420 = vsel %vm419, %v413, %v418
        %423 = vst [vmem:[#allocation3 + $0x18] sm:$0xcc] %v420
        %424 = vst.msk [vmem:[#allocation3 + $0x20] sm:$0xc] %vm303, %v415
        %v425 = vld [vmem:[%s249] sm:$0x3f]
        %v427 = vcombine.high %v425, %v425
        %v429 = vunpack.c.l.s4 1983009808
        %v430 = vunpack.c.0.s8 %v429
        %v431 = vlaneseq
        %v432 = vshrl.u32 %v431, 7
        %v433 = vsub.s32 %v430, %v432
        %v434 = vrot.slane %v425, %v433
        %v436 = vunpack.c.l.s4 1983009808
        %v437 = vunpack.c.0.s8 %v436
        %v438 = vlaneseq
        %v439 = vshrl.u32 %v438, 7
        %v440 = vsub.s32 %v437, %v439
        %v441 = vrot.slane %v427, %v440
        %442 = vrot.lane.b32.xlu0 %v434, 92
        %v443 = vpop.permute.xlu0 %442
        %444 = vrot.lane.b32.xlu0 %v441, 92
        %v445 = vpop.permute.xlu0 %444
        %v446 = vrot.slane %v443, 4
        %v447 = vrot.slane %v445, 4
        %v448 = vsel %vm296, %v446, %v447
        %vm449 = vcmask 752640
        %v450 = vsel %vm449, %v443, %v448
        %453 = vst [vmem:[#allocation3 + $0x24] sm:$0x33] %v450
        %454 = vst.msk [vmem:[#allocation3 + $0x2c] sm:$0x3] %vm271, %v445
        %v455 = vld [vmem:[%s249] sm:$0x3f]
        %v457 = vcombine.low %v455, %v455
        %v459 = vunpack.c.l.s4 1983009808
        %v460 = vunpack.c.0.s8 %v459
        %v461 = vlaneseq
        %v462 = vshrl.u32 %v461, 7
        %v463 = vsub.s32 %v460, %v462
        %v464 = vrot.slane %v457, %v463
        %v466 = vunpack.c.l.s4 1983009808
        %v467 = vunpack.c.0.s8 %v466
        %v468 = vlaneseq
        %v469 = vshrl.u32 %v468, 7
        %v470 = vsub.s32 %v467, %v469
        %v471 = vrot.slane %v455, %v470
        %472 = vrot.lane.b32.xlu0 %v464, 91
        %v473 = vpop.permute.xlu0 %472
        %474 = vrot.lane.b32.xlu0 %v471, 91
        %v475 = vpop.permute.xlu0 %474
        %v476 = vrot.slane %v473, 4
        %v477 = vrot.slane %v475, 4
        %v478 = vsel %vm296, %v476, %v477
        %vm479 = vcmask 744448
        %v480 = vsel %vm479, %v473, %v478
        %483 = vst [vmem:[#allocation3 + $0x24] sm:$0xcc] %v480
        %484 = vst.msk [vmem:[#allocation3 + $0x2c] sm:$0xc] %vm303, %v475
        %v485 = vld [vmem:[%s249] sm:$0x3f]
        %v487 = vcombine.high %v485, %v485
        %v489 = vunpack.c.l.s4 1983009808
        %v490 = vunpack.c.0.s8 %v489
        %v491 = vlaneseq
        %v492 = vshrl.u32 %v491, 7
        %v493 = vsub.s32 %v490, %v492
        %v494 = vrot.slane %v485, %v493
        %v496 = vunpack.c.l.s4 1983009808
        %v497 = vunpack.c.0.s8 %v496
        %v498 = vlaneseq
        %v499 = vshrl.u32 %v498, 7
        %v500 = vsub.s32 %v497, %v499
        %v501 = vrot.slane %v487, %v500
        %502 = vrot.lane.b32.xlu0 %v494, 90
        %v503 = vpop.permute.xlu0 %502
        %504 = vrot.lane.b32.xlu0 %v501, 90
        %v505 = vpop.permute.xlu0 %504
        %v506 = vrot.slane %v503, 4
        %v507 = vrot.slane %v505, 4
        %v508 = vsel %vm296, %v506, %v507
        %vm509 = vcmask 736256
        %v510 = vsel %vm509, %v503, %v508
        %513 = vst [vmem:[#allocation3 + $0x30] sm:$0x33] %v510
        %514 = vst.msk [vmem:[#allocation3 + $0x38] sm:$0x3] %vm271, %v505
        %v515 = vld [vmem:[%s2] sm:$0xf]
        %v516 = vld [vmem:[#allocation3] sm:$0xff]
        %v517 = vld [vmem:[#allocation3 + $0x8] sm:$0xf]
        %v518 = vld [vmem:[#allocation3 + $0xc] sm:$0xff]
        %v519 = vld [vmem:[#allocation3 + $0x14] sm:$0xf]
        %v520 = vld [vmem:[#allocation3 + $0x18] sm:$0xff]
        %v521 = vld [vmem:[#allocation3 + $0x20] sm:$0xf]
        %v522 = vld [vmem:[#allocation3 + $0x24] sm:$0xff]
        %v523 = vld [vmem:[#allocation3 + $0x2c] sm:$0xf]
        %v524 = vld [vmem:[#allocation3 + $0x30] sm:$0x33]
        %v525 = vld [vmem:[#allocation3 + $0x38] sm:$0x3]
        %v526 = vld [vmem:[%s3] sm:$0xff]
        %528 = vset.pattern.permute.xlu0 0
        %529 = vperm.xlu0 %528, %v526
        %v530 = vpop.permute.xlu0 %529
        %v542 = vunpack.c.l.b16 %v516
        %v543 = vunpack.c.h.b16 %v516
        %v544 = vunpack.c.l.b16 %v517
        %v545 = vunpack.c.l.b16 %v518
        %v546 = vunpack.c.h.b16 %v518
        %v547 = vunpack.c.l.b16 %v519
        %v548 = vunpack.c.l.b16 %v520
        %v549 = vunpack.c.h.b16 %v520
        %v550 = vunpack.c.l.b16 %v521
        %v551 = vunpack.c.l.b16 %v522
        %v552 = vunpack.c.h.b16 %v522
        %v553 = vunpack.c.l.b16 %v523
        %v554 = vunpack.c.l.b16 %v524
        %v555 = vunpack.c.h.b16 %v524
        %v556 = vunpack.c.l.b16 %v525
        %v557 = vpack.c.b16 %v545, %v542
        %v558 = vpack.c.b16 %v546, %v543
        %v559 = vpack.c.b16 %v547, %v544
        %v560 = vpack.c.b16 %v551, %v548
        %v561 = vpack.c.b16 %v552, %v549
        %v562 = vpack.c.b16 %v553, %v550
        %v563 = vpack.c.b16 %v554, %v554
        %v564 = vpack.c.b16 %v555, %v555
        %v565 = vpack.c.b16 %v556, %v556
        %vm572 = vcmask 293888
        %v574 = vsel %vm572, %v515, 0
        %vm576 = vcmask 1041408
        %v578 = vsel %vm576, %v563, 0
        %v581 = vsel %vm576, %v564, 0
        %v584 = vsel %vm576, %v565, 0
        %586 = vmatprep.subr.bf16.mxu0 %v558
        %587 = vmatpush1.bf16.msra.mxu0 %v557
        %588 = vmatprep.subr.bf16.mxu0 %v561
        %589 = vmatpush1.bf16.msra.mxu0 %v560
        %590 = vmatprep.subr.bf16.mxu0 %v581
        %591 = vmatpush1.bf16.msra.mxu0 %v578
        %592 = vmatprep.subr.bf16.mxu0 0
        %593 = vmatpush1.bf16.msra.mxu0 0
        %594 = vmatprep.subr.bf16.mxu0 0
        %595 = vmatpush1.bf16.msra.mxu0 0
        %596 = vmatprep.subr.bf16.mxu0 0
        %597 = vmatpush1.bf16.msra.mxu0 0
        %598 = vmatprep.subr.bf16.mxu0 0
        %599 = vmatpush1.bf16.msra.mxu0 0
        %600 = vmatprep.subr.bf16.mxu0 0
        %601 = vmatpush1.bf16.msra.mxu0 0
        %602 = vmatprep.subr.bf16.mxu0 0
        %603 = vmatpush1.bf16.msra.mxu0 0
        %604 = vmatprep.subr.bf16.mxu0 0
        %605 = vmatpush1.bf16.msra.mxu0 0
        %606 = vmatprep.subr.bf16.mxu0 0
        %607 = vmatpush1.bf16.msra.mxu0 0
        %608 = vmatprep.subr.bf16.mxu0 0
        %609 = vmatpush1.bf16.msra.mxu0 0
        %610 = vmatprep.subr.bf16.mxu0 0
        %611 = vmatpush1.bf16.msra.mxu0 0
        %612 = vmatprep.subr.bf16.mxu0 0
        %613 = vmatpush1.bf16.msra.mxu0 0
        %614 = vmatprep.subr.bf16.mxu0 0
        %615 = vmatpush1.bf16.msra.mxu0 0
        %616 = vmatprep.subr.bf16.mxu0 0
        %617 = vmatpush1.bf16.msra.mxu0 0
        %618 = vmatprep.mubr.bf16.mxu0 0
        %619 = vmatmul.mubr.bf16.gmra.mrb[0].mxu0 %v574
        %v620 = vpop.f32.mrb[0].mxu0
        %v621 = vadd.f32 %v530, %v620
        %v622 = vpop.f32.mrb[0].mxu0
        %v623 = vadd.f32 %v530, %v622
        %v624 = vpop.f32.mrb[0].mxu0
        %v625 = vpop.f32.mrb[0].mxu0
        %626 = vdwg.mxu0
        %627 = vmatprep.subr.bf16.mxu0 0
        %628 = vmatpush1.bf16.msra.mxu0 %v559
        %629 = vmatprep.subr.bf16.mxu0 0
        %630 = vmatpush1.bf16.msra.mxu0 %v562
        %631 = vmatprep.subr.bf16.mxu0 0
        %632 = vmatpush1.bf16.msra.mxu0 %v584
        %633 = vmatprep.subr.bf16.mxu0 0
        %634 = vmatpush1.bf16.msra.mxu0 0
        %635 = vmatprep.subr.bf16.mxu0 0
        %636 = vmatpush1.bf16.msra.mxu0 0
        %637 = vmatprep.subr.bf16.mxu0 0
        %638 = vmatpush1.bf16.msra.mxu0 0
        %639 = vmatprep.subr.bf16.mxu0 0
        %640 = vmatpush1.bf16.msra.mxu0 0
        %641 = vmatprep.subr.bf16.mxu0 0
        %642 = vmatpush1.bf16.msra.mxu0 0
        %643 = vmatprep.subr.bf16.mxu0 0
        %644 = vmatpush1.bf16.msra.mxu0 0
        %645 = vmatprep.subr.bf16.mxu0 0
        %646 = vmatpush1.bf16.msra.mxu0 0
        %647 = vmatprep.subr.bf16.mxu0 0
        %648 = vmatpush1.bf16.msra.mxu0 0
        %649 = vmatprep.subr.bf16.mxu0 0
        %650 = vmatpush1.bf16.msra.mxu0 0
        %651 = vmatprep.subr.bf16.mxu0 0
        %652 = vmatpush1.bf16.msra.mxu0 0
        %653 = vmatprep.subr.bf16.mxu0 0
        %654 = vmatpush1.bf16.msra.mxu0 0
        %655 = vmatprep.subr.bf16.mxu0 0
        %656 = vmatpush1.bf16.msra.mxu0 0
        %657 = vmatprep.subr.bf16.mxu0 0
        %658 = vmatpush1.bf16.msra.mxu0 0
        %659 = vmatprep.mubr.bf16.mxu0 0
        %660 = vmatmul.mubr.bf16.gmra.mrb[0].mxu0 %v574
        %v661 = vpop.f32.mrb[0].mxu0
        %v662 = vadd.f32 %v530, %v661
        %v663 = vpop.f32.mrb[0].mxu0
        %v664 = vpop.f32.mrb[0].mxu0
        %v665 = vpop.f32.mrb[0].mxu0
        %666 = vdwg.mxu0
        %v667 = vmax.f32 %v621, 0.0
        %v668 = vmax.f32 %v623, 0.0
        %v669 = vmax.f32 %v662, 0.0
        %v670 = vld [vmem:[%s0] sm:$0x7]
        %v672 = vlaneseq
        %v673 = vshrl.u32 %v672, 7
        %v674 = vsub.s32 0, %v673
        %v675 = vrot.slane %v670, %v674
        %v676 = vlaneseq
        %v677 = vshrl.u32 %v676, 7
        %v678 = vsub.s32 1, %v677
        %v679 = vrot.slane %v670, %v678
        %v680 = vlaneseq
        %v681 = vshrl.u32 %v680, 7
        %v682 = vsub.s32 2, %v681
        %v683 = vrot.slane %v670, %v682
        %v687 = vmul.f32 %v667, %v675
        %v688 = vmul.f32 %v668, %v679
        %v689 = vmul.f32 %v669, %v683
        %vm690 = vcmask 150528
        %691 = vst.msk [vmem:[#allocation2] sm:$0xf] %vm690, 0
        %vm692 = vcmask 568728
        %693 = vst.msk [vmem:[#allocation2 + $0x8] sm:$0xf] %vm692, 0
        %v694 = vpack.c.bf16 %v687, %v687
        %v695 = vpack.c.bf16 %v688, %v688
        %v696 = vpack.c.bf16 %v689, %v689
        %v700 = vunpack.c.l.b16 %v694
        %v701 = vunpack.c.l.b16 %v695
        %v702 = vunpack.c.l.b16 %v696
        %v703 = vpack.c.b16 %v701, %v700
        %v704 = vpack.c.b16 %v702, %v702
        %705 = vrot.lane.b32.xlu0 %v703, 19
        %v706 = vpop.permute.xlu0 %705
        %707 = vrot.lane.b32.xlu0 %v704, 19
        %v708 = vpop.permute.xlu0 %707
        %v709 = vrot.slane %v706, 4
        %vm710 = vcmask 154624
        %v711 = vsel %vm710, %v709, %v706
        %v712 = vsel %vm710, %v709, %v708
        %vm715 = vcmask 1043608
        %vm716 = vcmask 1047556
        %vm717 = vmor %vm716, %vm715
        %718 = vst.msk [vmem:[#allocation2] sm:$0xff] %vm717, %v711
        %vm719 = vcmask 412672
        %720 = vst.msk [vmem:[#allocation2 + $0x8] sm:$0xf] %vm719, %v712
        %v721 = vld [vmem:[#allocation2] sm:$0xff]
        %v722 = vld [vmem:[#allocation2 + $0x8] sm:$0xf]
        %723 = vst [vmem:[#allocation3] sm:$0xff] %v721
        %vm724 = vcmask 257024
        %725 = vst.msk [vmem:[#allocation3 + $0x8] sm:$0xf] %vm724, %v722
        %v726 = vld [vmem:[#allocation2] sm:$0xff]
        %v727 = vld [vmem:[#allocation2 + $0x8] sm:$0xf]
        %730 = vrot.lane.b32.xlu0 %v726, 127
        %v731 = vpop.permute.xlu0 %730
        %732 = vrot.lane.b32.xlu0 %v727, 127
        %v733 = vpop.permute.xlu0 %732
        %v734 = vrot.slane %v731, 4
        %v735 = vrot.slane %v733, 4
        %v736 = vsel %vm296, %v734, %v735
        %v737 = vsel %vm298, %v731, %v736
        %740 = vst [vmem:[#allocation3 + $0xc] sm:$0xff] %v737
        %741 = vst.msk [vmem:[#allocation3 + $0x14] sm:$0xf] %vm724, %v733
        %v742 = vld [vmem:[#allocation2] sm:$0xff]
        %v743 = vld [vmem:[#allocation2 + $0x8] sm:$0xf]
        %746 = vrot.lane.b32.xlu0 %v742, 126
        %v747 = vpop.permute.xlu0 %746
        %748 = vrot.lane.b32.xlu0 %v743, 126
        %v749 = vpop.permute.xlu0 %748
        %v750 = vrot.slane %v747, 4
        %v751 = vrot.slane %v749, 4
        %v752 = vsel %vm296, %v750, %v751
        %v753 = vsel %vm329, %v747, %v752
        %756 = vst [vmem:[#allocation3 + $0x18] sm:$0xff] %v753
        %757 = vst.msk [vmem:[#allocation3 + $0x20] sm:$0xf] %vm724, %v749
        %v758 = vld [vmem:[#allocation2] sm:$0xff]
        %v759 = vld [vmem:[#allocation2 + $0x8] sm:$0xf]
        %762 = vrot.lane.b32.xlu0 %v758, 110
        %v763 = vpop.permute.xlu0 %762
        %764 = vrot.lane.b32.xlu0 %v759, 110
        %v765 = vpop.permute.xlu0 %764
        %v766 = vrot.slane %v763, 4
        %v767 = vrot.slane %v765, 4
        %v768 = vsel %vm296, %v766, %v767
        %v769 = vsel %vm359, %v763, %v768
        %772 = vst [vmem:[#allocation3 + $0x24] sm:$0xff] %v769
        %773 = vst.msk [vmem:[#allocation3 + $0x2c] sm:$0xf] %vm724, %v765
        %v774 = vld [vmem:[#allocation2] sm:$0xff]
        %v775 = vld [vmem:[#allocation2 + $0x8] sm:$0xf]
        %778 = vrot.lane.b32.xlu0 %v774, 109
        %v779 = vpop.permute.xlu0 %778
        %780 = vrot.lane.b32.xlu0 %v775, 109
        %v781 = vpop.permute.xlu0 %780
        %v782 = vrot.slane %v779, 4
        %v783 = vrot.slane %v781, 4
        %v784 = vsel %vm296, %v782, %v783
        %v785 = vsel %vm389, %v779, %v784
        %788 = vst [vmem:[#allocation3 + $0x30] sm:$0xff] %v785
        %789 = vst.msk [vmem:[#allocation3 + $0x38] sm:$0xf] %vm724, %v781
        %v790 = vld [vmem:[#allocation2] sm:$0xff]
        %v791 = vld [vmem:[#allocation2 + $0x8] sm:$0xf]
        %794 = vrot.lane.b32.xlu0 %v790, 108
        %v795 = vpop.permute.xlu0 %794
        %796 = vrot.lane.b32.xlu0 %v791, 108
        %v797 = vpop.permute.xlu0 %796
        %v798 = vrot.slane %v795, 4
        %v799 = vrot.slane %v797, 4
        %v800 = vsel %vm296, %v798, %v799
        %v801 = vsel %vm419, %v795, %v800
        %804 = vst [vmem:[#allocation3 + $0x3c] sm:$0xff] %v801
        %805 = vst.msk [vmem:[#allocation3 + $0x44] sm:$0xf] %vm724, %v797
        %v806 = vld [vmem:[#allocation2] sm:$0xff]
        %v807 = vld [vmem:[#allocation2 + $0x8] sm:$0xf]
        %810 = vrot.lane.b32.xlu0 %v806, 92
        %v811 = vpop.permute.xlu0 %810
        %812 = vrot.lane.b32.xlu0 %v807, 92
        %v813 = vpop.permute.xlu0 %812
        %v814 = vrot.slane %v811, 4
        %v815 = vrot.slane %v813, 4
        %v816 = vsel %vm296, %v814, %v815
        %v817 = vsel %vm449, %v811, %v816
        %820 = vst [vmem:[#allocation3 + $0x48] sm:$0xff] %v817
        %821 = vst.msk [vmem:[#allocation3 + $0x50] sm:$0xf] %vm724, %v813
        %v822 = vld [vmem:[#allocation2] sm:$0xff]
        %v823 = vld [vmem:[#allocation2 + $0x8] sm:$0xf]
        %826 = vrot.lane.b32.xlu0 %v822, 91
        %v827 = vpop.permute.xlu0 %826
        %828 = vrot.lane.b32.xlu0 %v823, 91
        %v829 = vpop.permute.xlu0 %828
        %v830 = vrot.slane %v827, 4
        %v831 = vrot.slane %v829, 4
        %v832 = vsel %vm296, %v830, %v831
        %v833 = vsel %vm479, %v827, %v832
        %836 = vst [vmem:[#allocation3 + $0x54] sm:$0xff] %v833
        %837 = vst.msk [vmem:[#allocation3 + $0x5c] sm:$0xf] %vm724, %v829
        %v838 = vld [vmem:[#allocation2] sm:$0xff]
        %v839 = vld [vmem:[#allocation2 + $0x8] sm:$0xf]
        %842 = vrot.lane.b32.xlu0 %v838, 90
        %v843 = vpop.permute.xlu0 %842
        %844 = vrot.lane.b32.xlu0 %v839, 90
        %v845 = vpop.permute.xlu0 %844
        %v846 = vrot.slane %v843, 4
        %v847 = vrot.slane %v845, 4
        %v848 = vsel %vm296, %v846, %v847
        %v849 = vsel %vm509, %v843, %v848
        %852 = vst [vmem:[#allocation3 + $0x60] sm:$0xff] %v849
        %853 = vst.msk [vmem:[#allocation3 + $0x68] sm:$0xf] %vm724, %v845
        %v854 = vld [vmem:[%s4] sm:$0xf]
        %v855 = vld [vmem:[#allocation3] sm:$0xff]
        %v856 = vld [vmem:[#allocation3 + $0x8] sm:$0xf]
        %v857 = vld [vmem:[#allocation3 + $0xc] sm:$0xff]
        %v858 = vld [vmem:[#allocation3 + $0x14] sm:$0xf]
        %v859 = vld [vmem:[#allocation3 + $0x18] sm:$0xff]
        %v860 = vld [vmem:[#allocation3 + $0x20] sm:$0xf]
        %v861 = vld [vmem:[#allocation3 + $0x24] sm:$0xff]
        %v862 = vld [vmem:[#allocation3 + $0x2c] sm:$0xf]
        %v863 = vld [vmem:[#allocation3 + $0x30] sm:$0xff]
        %v864 = vld [vmem:[#allocation3 + $0x38] sm:$0xf]
        %v865 = vld [vmem:[#allocation3 + $0x3c] sm:$0xff]
        %v866 = vld [vmem:[#allocation3 + $0x44] sm:$0xf]
        %v867 = vld [vmem:[#allocation3 + $0x48] sm:$0xff]
        %v868 = vld [vmem:[#allocation3 + $0x50] sm:$0xf]
        %v869 = vld [vmem:[#allocation3 + $0x54] sm:$0xff]
        %v870 = vld [vmem:[#allocation3 + $0x5c] sm:$0xf]
        %v871 = vld [vmem:[#allocation3 + $0x60] sm:$0xff]
        %v872 = vld [vmem:[#allocation3 + $0x68] sm:$0xf]
        %v873 = vld [vmem:[%s5] sm:$0xff]
        %875 = vset.pattern.permute.xlu0 0
        %876 = vperm.xlu0 %875, %v873
        %v877 = vpop.permute.xlu0 %876
        %v897 = vunpack.c.l.b16 %v855
        %v898 = vunpack.c.h.b16 %v855
        %v899 = vunpack.c.l.b16 %v856
        %v900 = vunpack.c.l.b16 %v857
        %v901 = vunpack.c.h.b16 %v857
        %v902 = vunpack.c.l.b16 %v858
        %v903 = vunpack.c.l.b16 %v859
        %v904 = vunpack.c.h.b16 %v859
        %v905 = vunpack.c.l.b16 %v860
        %v906 = vunpack.c.l.b16 %v861
        %v907 = vunpack.c.h.b16 %v861
        %v908 = vunpack.c.l.b16 %v862
        %v909 = vunpack.c.l.b16 %v863
        %v910 = vunpack.c.h.b16 %v863
        %v911 = vunpack.c.l.b16 %v864
        %v912 = vunpack.c.l.b16 %v865
        %v913 = vunpack.c.h.b16 %v865
        %v914 = vunpack.c.l.b16 %v866
        %v915 = vunpack.c.l.b16 %v867
        %v916 = vunpack.c.h.b16 %v867
        %v917 = vunpack.c.l.b16 %v868
        %v918 = vunpack.c.l.b16 %v869
        %v919 = vunpack.c.h.b16 %v869
        %v920 = vunpack.c.l.b16 %v870
        %v921 = vunpack.c.l.b16 %v871
        %v922 = vunpack.c.h.b16 %v871
        %v923 = vunpack.c.l.b16 %v872
        %v924 = vpack.c.b16 %v900, %v897
        %v925 = vpack.c.b16 %v901, %v898
        %v926 = vpack.c.b16 %v902, %v899
        %v927 = vpack.c.b16 %v906, %v903
        %v928 = vpack.c.b16 %v907, %v904
        %v929 = vpack.c.b16 %v908, %v905
        %v930 = vpack.c.b16 %v912, %v909
        %v931 = vpack.c.b16 %v913, %v910
        %v932 = vpack.c.b16 %v914, %v911
        %v933 = vpack.c.b16 %v918, %v915
        %v934 = vpack.c.b16 %v919, %v916
        %v935 = vpack.c.b16 %v920, %v917
        %v936 = vpack.c.b16 %v921, %v921
        %v937 = vpack.c.b16 %v922, %v922
        %v938 = vpack.c.b16 %v923, %v923
        %vm951 = vcmask 588800
        %v953 = vsel %vm951, %v854, 0
        %vm955 = vcmask 1043456
        %v957 = vsel %vm955, %v936, 0
        %v960 = vsel %vm955, %v937, 0
        %v963 = vsel %vm955, %v938, 0
        %965 = vmatprep.subr.bf16.mxu0 %v925
        %966 = vmatpush1.bf16.msra.mxu0 %v924
        %967 = vmatprep.subr.bf16.mxu0 %v928
        %968 = vmatpush1.bf16.msra.mxu0 %v927
        %969 = vmatprep.subr.bf16.mxu0 %v931
        %970 = vmatpush1.bf16.msra.mxu0 %v930
        %971 = vmatprep.subr.bf16.mxu0 %v934
        %972 = vmatpush1.bf16.msra.mxu0 %v933
        %973 = vmatprep.subr.bf16.mxu0 %v960
        %974 = vmatpush1.bf16.msra.mxu0 %v957
        %975 = vmatprep.subr.bf16.mxu0 0
        %976 = vmatpush1.bf16.msra.mxu0 0
        %977 = vmatprep.subr.bf16.mxu0 0
        %978 = vmatpush1.bf16.msra.mxu0 0
        %979 = vmatprep.subr.bf16.mxu0 0
        %980 = vmatpush1.bf16.msra.mxu0 0
        %981 = vmatprep.subr.bf16.mxu0 0
        %982 = vmatpush1.bf16.msra.mxu0 0
        %983 = vmatprep.subr.bf16.mxu0 0
        %984 = vmatpush1.bf16.msra.mxu0 0
        %985 = vmatprep.subr.bf16.mxu0 0
        %986 = vmatpush1.bf16.msra.mxu0 0
        %987 = vmatprep.subr.bf16.mxu0 0
        %988 = vmatpush1.bf16.msra.mxu0 0
        %989 = vmatprep.subr.bf16.mxu0 0
        %990 = vmatpush1.bf16.msra.mxu0 0
        %991 = vmatprep.subr.bf16.mxu0 0
        %992 = vmatpush1.bf16.msra.mxu0 0
        %993 = vmatprep.subr.bf16.mxu0 0
        %994 = vmatpush1.bf16.msra.mxu0 0
        %995 = vmatprep.subr.bf16.mxu0 0
        %996 = vmatpush1.bf16.msra.mxu0 0
        %997 = vmatprep.mubr.bf16.mxu0 0
        %998 = vmatmul.mubr.bf16.gmra.mrb[0].mxu0 %v953
        %v999 = vpop.f32.mrb[0].mxu0
        %v1000 = vadd.f32 %v877, %v999
        %v1001 = vpop.f32.mrb[0].mxu0
        %v1002 = vadd.f32 %v877, %v1001
        %v1003 = vpop.f32.mrb[0].mxu0
        %v1004 = vpop.f32.mrb[0].mxu0
        %1005 = vdwg.mxu0
        %1006 = vmatprep.subr.bf16.mxu0 0
        %1007 = vmatpush1.bf16.msra.mxu0 %v926
        %1008 = vmatprep.subr.bf16.mxu0 0
        %1009 = vmatpush1.bf16.msra.mxu0 %v929
        %1010 = vmatprep.subr.bf16.mxu0 0
        %1011 = vmatpush1.bf16.msra.mxu0 %v932
        %1012 = vmatprep.subr.bf16.mxu0 0
        %1013 = vmatpush1.bf16.msra.mxu0 %v935
        %1014 = vmatprep.subr.bf16.mxu0 0
        %1015 = vmatpush1.bf16.msra.mxu0 %v963
        %1016 = vmatprep.subr.bf16.mxu0 0
        %1017 = vmatpush1.bf16.msra.mxu0 0
        %1018 = vmatprep.subr.bf16.mxu0 0
        %1019 = vmatpush1.bf16.msra.mxu0 0
        %1020 = vmatprep.subr.bf16.mxu0 0
        %1021 = vmatpush1.bf16.msra.mxu0 0
        %1022 = vmatprep.subr.bf16.mxu0 0
        %1023 = vmatpush1.bf16.msra.mxu0 0
        %1024 = vmatprep.subr.bf16.mxu0 0
        %1025 = vmatpush1.bf16.msra.mxu0 0
        %1026 = vmatprep.subr.bf16.mxu0 0
        %1027 = vmatpush1.bf16.msra.mxu0 0
        %1028 = vmatprep.subr.bf16.mxu0 0
        %1029 = vmatpush1.bf16.msra.mxu0 0
        %1030 = vmatprep.subr.bf16.mxu0 0
        %1031 = vmatpush1.bf16.msra.mxu0 0
        %1032 = vmatprep.subr.bf16.mxu0 0
        %1033 = vmatpush1.bf16.msra.mxu0 0
        %1034 = vmatprep.subr.bf16.mxu0 0
        %1035 = vmatpush1.bf16.msra.mxu0 0
        %1036 = vmatprep.subr.bf16.mxu0 0
        %1037 = vmatpush1.bf16.msra.mxu0 0
        %1038 = vmatprep.mubr.bf16.mxu0 0
        %1039 = vmatmul.mubr.bf16.gmra.mrb[0].mxu0 %v953
        %v1040 = vpop.f32.mrb[0].mxu0
        %v1041 = vadd.f32 %v877, %v1040
        %v1042 = vpop.f32.mrb[0].mxu0
        %v1043 = vpop.f32.mrb[0].mxu0
        %v1044 = vpop.f32.mrb[0].mxu0
        %1045 = vdwg.mxu0
        %v1046 = vmax.f32 %v1000, 0.0
        %v1047 = vmax.f32 %v1002, 0.0
        %v1048 = vmax.f32 %v1041, 0.0
        %1050 = vrot.lane.b32.xlu0 %v1046, 110
        %v1051 = vpop.permute.xlu0 %1050
        %1053 = vrot.lane.b32.xlu0 %v1046, 92
        %v1054 = vpop.permute.xlu0 %1053
        %1056 = vrot.lane.b32.xlu0 %v1046, 74
        %v1057 = vpop.permute.xlu0 %1056
        %1059 = vrot.lane.b32.xlu0 %v1046, 56
        %v1060 = vpop.permute.xlu0 %1059
        %1062 = vrot.lane.b32.xlu0 %v1046, 38
        %v1063 = vpop.permute.xlu0 %1062
        %1065 = vrot.lane.b32.xlu0 %v1046, 20
        %v1066 = vpop.permute.xlu0 %1065
        %1069 = vrot.lane.b32.xlu0 %v1046, 2
        %v1070 = vpop.permute.xlu0 %1069
        %1071 = vrot.lane.b32.xlu0 %v1047, 2
        %v1072 = vpop.permute.xlu0 %1071
        %vm1073 = vcmask 15360
        %v1074 = vsel %vm1073, %v1070, %v1072
        %1076 = vrot.lane.b32.xlu0 %v1047, 112
        %v1077 = vpop.permute.xlu0 %1076
        %1079 = vrot.lane.b32.xlu0 %v1047, 94
        %v1080 = vpop.permute.xlu0 %1079
        %1082 = vrot.lane.b32.xlu0 %v1047, 76
        %v1083 = vpop.permute.xlu0 %1082
        %1085 = vrot.lane.b32.xlu0 %v1047, 58
        %v1086 = vpop.permute.xlu0 %1085
        %1088 = vrot.lane.b32.xlu0 %v1047, 40
        %v1089 = vpop.permute.xlu0 %1088
        %1091 = vrot.lane.b32.xlu0 %v1047, 22
        %v1092 = vpop.permute.xlu0 %1091
        %1095 = vrot.lane.b32.xlu0 %v1047, 4
        %v1096 = vpop.permute.xlu0 %1095
        %1097 = vrot.lane.b32.xlu0 %v1048, 4
        %v1098 = vpop.permute.xlu0 %1097
        %vm1099 = vcmask 31744
        %v1100 = vsel %vm1099, %v1096, %v1098
        %1102 = vrot.lane.b32.xlu0 %v1048, 114
        %v1103 = vpop.permute.xlu0 %1102
        %v1105 = vcombine.low %v1046, %v1054
        %v1106 = vcombine.high %v1046, %v1054
        %v1108 = vunpack.c.l.s4 1983009808
        %v1109 = vunpack.c.0.s8 %v1108
        %v1110 = vlaneseq
        %v1111 = vshrl.u32 %v1110, 7
        %v1112 = vsub.s32 %v1109, %v1111
        %v1113 = vrot.slane %v1105, %v1112
        %v1115 = vunpack.c.l.s4 1983009808
        %v1116 = vunpack.c.0.s8 %v1115
        %v1117 = vlaneseq
        %v1118 = vshrl.u32 %v1117, 7
        %v1119 = vsub.s32 %v1116, %v1118
        %v1120 = vrot.slane %v1106, %v1119
        %v1121 = vcombine.low %v1051, %v1057
        %v1122 = vcombine.high %v1051, %v1057
        %v1124 = vunpack.c.l.s4 1983009808
        %v1125 = vunpack.c.0.s8 %v1124
        %v1126 = vlaneseq
        %v1127 = vshrl.u32 %v1126, 7
        %v1128 = vsub.s32 %v1125, %v1127
        %v1129 = vrot.slane %v1121, %v1128
        %v1131 = vunpack.c.l.s4 1983009808
        %v1132 = vunpack.c.0.s8 %v1131
        %v1133 = vlaneseq
        %v1134 = vshrl.u32 %v1133, 7
        %v1135 = vsub.s32 %v1132, %v1134
        %v1136 = vrot.slane %v1122, %v1135
        %v1137 = vcombine.low %v1060, %v1066
        %v1138 = vcombine.high %v1060, %v1066
        %v1140 = vunpack.c.l.s4 1983009808
        %v1141 = vunpack.c.0.s8 %v1140
        %v1142 = vlaneseq
        %v1143 = vshrl.u32 %v1142, 7
        %v1144 = vsub.s32 %v1141, %v1143
        %v1145 = vrot.slane %v1137, %v1144
        %v1147 = vunpack.c.l.s4 1983009808
        %v1148 = vunpack.c.0.s8 %v1147
        %v1149 = vlaneseq
        %v1150 = vshrl.u32 %v1149, 7
        %v1151 = vsub.s32 %v1148, %v1150
        %v1152 = vrot.slane %v1138, %v1151
        %v1153 = vcombine.low %v1063, %v1074
        %v1154 = vcombine.high %v1063, %v1074
        %v1156 = vunpack.c.l.s4 1983009808
        %v1157 = vunpack.c.0.s8 %v1156
        %v1158 = vlaneseq
        %v1159 = vshrl.u32 %v1158, 7
        %v1160 = vsub.s32 %v1157, %v1159
        %v1161 = vrot.slane %v1153, %v1160
        %v1163 = vunpack.c.l.s4 1983009808
        %v1164 = vunpack.c.0.s8 %v1163
        %v1165 = vlaneseq
        %v1166 = vshrl.u32 %v1165, 7
        %v1167 = vsub.s32 %v1164, %v1166
        %v1168 = vrot.slane %v1154, %v1167
        %v1169 = vcombine.low %v1113, %v1129
        %v1170 = vcombine.high %v1113, %v1129
        %v1172 = vunpack.c.l.s4 1934713408
        %v1173 = vunpack.c.0.s8 %v1172
        %v1174 = vlaneseq
        %v1175 = vshrl.u32 %v1174, 7
        %v1176 = vsub.s32 %v1173, %v1175
        %v1177 = vrot.slane %v1169, %v1176
        %v1179 = vunpack.c.l.s4 1934713408
        %v1180 = vunpack.c.0.s8 %v1179
        %v1181 = vlaneseq
        %v1182 = vshrl.u32 %v1181, 7
        %v1183 = vsub.s32 %v1180, %v1182
        %v1184 = vrot.slane %v1170, %v1183
        %v1185 = vcombine.low %v1120, %v1136
        %v1186 = vcombine.high %v1120, %v1136
        %v1188 = vunpack.c.l.s4 1934713408
        %v1189 = vunpack.c.0.s8 %v1188
        %v1190 = vlaneseq
        %v1191 = vshrl.u32 %v1190, 7
        %v1192 = vsub.s32 %v1189, %v1191
        %v1193 = vrot.slane %v1185, %v1192
        %v1195 = vunpack.c.l.s4 1934713408
        %v1196 = vunpack.c.0.s8 %v1195
        %v1197 = vlaneseq
        %v1198 = vshrl.u32 %v1197, 7
        %v1199 = vsub.s32 %v1196, %v1198
        %v1200 = vrot.slane %v1186, %v1199
        %v1201 = vcombine.low %v1145, %v1161
        %v1202 = vcombine.high %v1145, %v1161
        %v1204 = vunpack.c.l.s4 1934713408
        %v1205 = vunpack.c.0.s8 %v1204
        %v1206 = vlaneseq
        %v1207 = vshrl.u32 %v1206, 7
        %v1208 = vsub.s32 %v1205, %v1207
        %v1209 = vrot.slane %v1201, %v1208
        %v1211 = vunpack.c.l.s4 1934713408
        %v1212 = vunpack.c.0.s8 %v1211
        %v1213 = vlaneseq
        %v1214 = vshrl.u32 %v1213, 7
        %v1215 = vsub.s32 %v1212, %v1214
        %v1216 = vrot.slane %v1202, %v1215
        %v1217 = vcombine.low %v1152, %v1168
        %v1218 = vcombine.high %v1152, %v1168
        %v1220 = vunpack.c.l.s4 1934713408
        %v1221 = vunpack.c.0.s8 %v1220
        %v1222 = vlaneseq
        %v1223 = vshrl.u32 %v1222, 7
        %v1224 = vsub.s32 %v1221, %v1223
        %v1225 = vrot.slane %v1217, %v1224
        %v1227 = vunpack.c.l.s4 1934713408
        %v1228 = vunpack.c.0.s8 %v1227
        %v1229 = vlaneseq
        %v1230 = vshrl.u32 %v1229, 7
        %v1231 = vsub.s32 %v1228, %v1230
        %v1232 = vrot.slane %v1218, %v1231
        %v1233 = vcombine.low %v1177, %v1209
        %v1234 = vcombine.high %v1177, %v1209
        %v1235 = vcombine.low %v1184, %v1216
        %v1236 = vcombine.high %v1184, %v1216
        %v1237 = vcombine.low %v1193, %v1225
        %v1238 = vcombine.high %v1193, %v1225
        %v1239 = vcombine.low %v1200, %v1232
        %v1240 = vcombine.high %v1200, %v1232
        %v1241 = vcombine.low %v1077, %v1083
        %v1242 = vcombine.high %v1077, %v1083
        %v1244 = vunpack.c.l.s4 1983009808
        %v1245 = vunpack.c.0.s8 %v1244
        %v1246 = vlaneseq
        %v1247 = vshrl.u32 %v1246, 7
        %v1248 = vsub.s32 %v1245, %v1247
        %v1249 = vrot.slane %v1241, %v1248
        %v1251 = vunpack.c.l.s4 1983009808
        %v1252 = vunpack.c.0.s8 %v1251
        %v1253 = vlaneseq
        %v1254 = vshrl.u32 %v1253, 7
        %v1255 = vsub.s32 %v1252, %v1254
        %v1256 = vrot.slane %v1242, %v1255
        %v1257 = vcombine.low %v1080, %v1086
        %v1258 = vcombine.high %v1080, %v1086
        %v1260 = vunpack.c.l.s4 1983009808
        %v1261 = vunpack.c.0.s8 %v1260
        %v1262 = vlaneseq
        %v1263 = vshrl.u32 %v1262, 7
        %v1264 = vsub.s32 %v1261, %v1263
        %v1265 = vrot.slane %v1257, %v1264
        %v1267 = vunpack.c.l.s4 1983009808
        %v1268 = vunpack.c.0.s8 %v1267
        %v1269 = vlaneseq
        %v1270 = vshrl.u32 %v1269, 7
        %v1271 = vsub.s32 %v1268, %v1270
        %v1272 = vrot.slane %v1258, %v1271
        %v1273 = vcombine.low %v1089, %v1100
        %v1274 = vcombine.high %v1089, %v1100
        %v1276 = vunpack.c.l.s4 1983009808
        %v1277 = vunpack.c.0.s8 %v1276
        %v1278 = vlaneseq
        %v1279 = vshrl.u32 %v1278, 7
        %v1280 = vsub.s32 %v1277, %v1279
        %v1281 = vrot.slane %v1273, %v1280
        %v1283 = vunpack.c.l.s4 1983009808
        %v1284 = vunpack.c.0.s8 %v1283
        %v1285 = vlaneseq
        %v1286 = vshrl.u32 %v1285, 7
        %v1287 = vsub.s32 %v1284, %v1286
        %v1288 = vrot.slane %v1274, %v1287
        %v1289 = vcombine.low %v1092, %v1103
        %v1290 = vcombine.high %v1092, %v1103
        %v1292 = vunpack.c.l.s4 1983009808
        %v1293 = vunpack.c.0.s8 %v1292
        %v1294 = vlaneseq
        %v1295 = vshrl.u32 %v1294, 7
        %v1296 = vsub.s32 %v1293, %v1295
        %v1297 = vrot.slane %v1289, %v1296
        %v1299 = vunpack.c.l.s4 1983009808
        %v1300 = vunpack.c.0.s8 %v1299
        %v1301 = vlaneseq
        %v1302 = vshrl.u32 %v1301, 7
        %v1303 = vsub.s32 %v1300, %v1302
        %v1304 = vrot.slane %v1290, %v1303
        %v1305 = vcombine.low %v1249, %v1265
        %v1306 = vcombine.high %v1249, %v1265
        %v1308 = vunpack.c.l.s4 1934713408
        %v1309 = vunpack.c.0.s8 %v1308
        %v1310 = vlaneseq
        %v1311 = vshrl.u32 %v1310, 7
        %v1312 = vsub.s32 %v1309, %v1311
        %v1313 = vrot.slane %v1305, %v1312
        %v1315 = vunpack.c.l.s4 1934713408
        %v1316 = vunpack.c.0.s8 %v1315
        %v1317 = vlaneseq
        %v1318 = vshrl.u32 %v1317, 7
        %v1319 = vsub.s32 %v1316, %v1318
        %v1320 = vrot.slane %v1306, %v1319
        %v1321 = vcombine.low %v1256, %v1272
        %v1322 = vcombine.high %v1256, %v1272
        %v1324 = vunpack.c.l.s4 1934713408
        %v1325 = vunpack.c.0.s8 %v1324
        %v1326 = vlaneseq
        %v1327 = vshrl.u32 %v1326, 7
        %v1328 = vsub.s32 %v1325, %v1327
        %v1329 = vrot.slane %v1321, %v1328
        %v1331 = vunpack.c.l.s4 1934713408
        %v1332 = vunpack.c.0.s8 %v1331
        %v1333 = vlaneseq
        %v1334 = vshrl.u32 %v1333, 7
        %v1335 = vsub.s32 %v1332, %v1334
        %v1336 = vrot.slane %v1322, %v1335
        %v1337 = vcombine.low %v1281, %v1297
        %v1338 = vcombine.high %v1281, %v1297
        %v1340 = vunpack.c.l.s4 1934713408
        %v1341 = vunpack.c.0.s8 %v1340
        %v1342 = vlaneseq
        %v1343 = vshrl.u32 %v1342, 7
        %v1344 = vsub.s32 %v1341, %v1343
        %v1345 = vrot.slane %v1337, %v1344
        %v1347 = vunpack.c.l.s4 1934713408
        %v1348 = vunpack.c.0.s8 %v1347
        %v1349 = vlaneseq
        %v1350 = vshrl.u32 %v1349, 7
        %v1351 = vsub.s32 %v1348, %v1350
        %v1352 = vrot.slane %v1338, %v1351
        %v1353 = vcombine.low %v1288, %v1304
        %v1354 = vcombine.high %v1288, %v1304
        %v1356 = vunpack.c.l.s4 1934713408
        %v1357 = vunpack.c.0.s8 %v1356
        %v1358 = vlaneseq
        %v1359 = vshrl.u32 %v1358, 7
        %v1360 = vsub.s32 %v1357, %v1359
        %v1361 = vrot.slane %v1353, %v1360
        %v1363 = vunpack.c.l.s4 1934713408
        %v1364 = vunpack.c.0.s8 %v1363
        %v1365 = vlaneseq
        %v1366 = vshrl.u32 %v1365, 7
        %v1367 = vsub.s32 %v1364, %v1366
        %v1368 = vrot.slane %v1354, %v1367
        %v1369 = vcombine.low %v1313, %v1345
        %v1370 = vcombine.high %v1313, %v1345
        %v1371 = vcombine.low %v1320, %v1352
        %v1372 = vcombine.high %v1320, %v1352
        %v1373 = vcombine.low %v1329, %v1361
        %v1374 = vcombine.high %v1329, %v1361
        %v1375 = vcombine.low %v1336, %v1368
        %v1376 = vcombine.high %v1336, %v1368
        %v1377 = vpack.c.bf16 %v1369, %v1233
        %v1378 = vpack.c.bf16 %v1370, %v1234
        %v1379 = vpack.c.bf16 %v1371, %v1235
        %v1380 = vpack.c.bf16 %v1372, %v1236
        %v1381 = vpack.c.bf16 %v1373, %v1237
        %v1382 = vpack.c.bf16 %v1374, %v1238
        %v1383 = vpack.c.bf16 %v1375, %v1239
        %v1384 = vpack.c.bf16 %v1376, %v1240
        %v1393 = vunpack.c.l.b16 %v1377
        %v1394 = vunpack.c.h.b16 %v1377
        %v1395 = vunpack.c.l.b16 %v1378
        %v1396 = vunpack.c.h.b16 %v1378
        %v1397 = vunpack.c.l.b16 %v1379
        %v1398 = vunpack.c.h.b16 %v1379
        %v1399 = vunpack.c.l.b16 %v1380
        %v1400 = vunpack.c.h.b16 %v1380
        %v1401 = vunpack.c.l.b16 %v1381
        %v1402 = vunpack.c.h.b16 %v1381
        %v1403 = vunpack.c.l.b16 %v1382
        %v1404 = vunpack.c.h.b16 %v1382
        %v1405 = vunpack.c.l.b16 %v1383
        %v1406 = vunpack.c.h.b16 %v1383
        %v1407 = vunpack.c.l.b16 %v1384
        %v1408 = vunpack.c.h.b16 %v1384
        %v1409 = vpack.c.b16 %v1393, %v1393
        %v1410 = vpack.c.b16 %v1394, %v1394
        %v1411 = vpack.c.b16 %v1395, %v1395
        %v1412 = vpack.c.b16 %v1396, %v1396
        %v1413 = vpack.c.b16 %v1397, %v1397
        %v1414 = vpack.c.b16 %v1398, %v1398
        %v1415 = vpack.c.b16 %v1399, %v1399
        %v1416 = vpack.c.b16 %v1400, %v1400
        %v1417 = vpack.c.b16 %v1401, %v1401
        %v1418 = vpack.c.b16 %v1402, %v1402
        %v1419 = vpack.c.b16 %v1403, %v1403
        %v1420 = vpack.c.b16 %v1404, %v1404
        %v1421 = vpack.c.b16 %v1405, %v1405
        %v1422 = vpack.c.b16 %v1406, %v1406
        %v1423 = vpack.c.b16 %v1407, %v1407
        %v1424 = vpack.c.b16 %v1408, %v1408
        %1425 = vrot.lane.b32.xlu0 %v1409, 127
        %v1426 = vpop.permute.xlu0 %1425
        %1427 = vrot.lane.b32.xlu0 %v1410, 127
        %v1428 = vpop.permute.xlu0 %1427
        %1429 = vrot.lane.b32.xlu0 %v1411, 127
        %v1430 = vpop.permute.xlu0 %1429
        %1431 = vrot.lane.b32.xlu0 %v1412, 127
        %v1432 = vpop.permute.xlu0 %1431
        %1433 = vrot.lane.b32.xlu0 %v1413, 127
        %v1434 = vpop.permute.xlu0 %1433
        %1435 = vrot.lane.b32.xlu0 %v1414, 127
        %v1436 = vpop.permute.xlu0 %1435
        %1437 = vrot.lane.b32.xlu0 %v1415, 127
        %v1438 = vpop.permute.xlu0 %1437
        %1439 = vrot.lane.b32.xlu0 %v1416, 127
        %v1440 = vpop.permute.xlu0 %1439
        %1441 = vrot.lane.b32.xlu0 %v1417, 127
        %v1442 = vpop.permute.xlu0 %1441
        %1443 = vrot.lane.b32.xlu0 %v1418, 127
        %v1444 = vpop.permute.xlu0 %1443
        %1445 = vrot.lane.b32.xlu0 %v1419, 127
        %v1446 = vpop.permute.xlu0 %1445
        %1447 = vrot.lane.b32.xlu0 %v1420, 127
        %v1448 = vpop.permute.xlu0 %1447
        %1449 = vrot.lane.b32.xlu0 %v1421, 127
        %v1450 = vpop.permute.xlu0 %1449
        %1451 = vrot.lane.b32.xlu0 %v1422, 127
        %v1452 = vpop.permute.xlu0 %1451
        %1453 = vrot.lane.b32.xlu0 %v1423, 127
        %v1454 = vpop.permute.xlu0 %1453
        %1455 = vrot.lane.b32.xlu0 %v1424, 127
        %v1456 = vpop.permute.xlu0 %1455
        %vm1473 = vcmask 125952
        %1474 = vst.msk [vmem:[%s244] sm:$0xf] %vm1473, %v1426
        %1475 = vst.msk [vmem:[%s244 + $0x4] sm:$0xf] %vm1473, %v1428
        %1476 = vst.msk [vmem:[%s244 + $0x8] sm:$0xf] %vm1473, %v1430
        %1477 = vst.msk [vmem:[%s244 + $0xc] sm:$0xf] %vm1473, %v1432
        %1478 = vst.msk [vmem:[%s244 + $0x10] sm:$0xf] %vm1473, %v1434
        %1479 = vst.msk [vmem:[%s244 + $0x14] sm:$0xf] %vm1473, %v1436
        %1480 = vst.msk [vmem:[%s244 + $0x18] sm:$0xf] %vm1473, %v1438
        %1481 = vst.msk [vmem:[%s244 + $0x1c] sm:$0xf] %vm1473, %v1440
        %1482 = vst.msk [vmem:[%s244 + $0x20] sm:$0xf] %vm1473, %v1442
        %1483 = vst.msk [vmem:[%s244 + $0x24] sm:$0xf] %vm1473, %v1444
        %1484 = vst.msk [vmem:[%s244 + $0x28] sm:$0xf] %vm1473, %v1446
        %1485 = vst.msk [vmem:[%s244 + $0x2c] sm:$0xf] %vm1473, %v1448
        %1486 = vst.msk [vmem:[%s244 + $0x30] sm:$0xf] %vm1473, %v1450
        %1487 = vst.msk [vmem:[%s244 + $0x34] sm:$0xf] %vm1473, %v1452
        %1488 = vst.msk [vmem:[%s244 + $0x38] sm:$0xf] %vm1473, %v1454
        %1489 = vst.msk [vmem:[%s244 + $0x3c] sm:$0xf] %vm1473, %v1456
        %s1490 = sand.u32 %s159, 1
        %s1491 = scalar_lea.sflag [#allocation5], %s1490
        %s1492 = sand.u32 %s159, 1
        %s1493 = smul.addr %s1492, 64
        %s1494 = scalar_lea.vmem [#allocation4], %s1493
        // Predicated region
        $region45: #{decoder_module_forward.1} parent=43 // pred_check
          %p1495 = pneg %p169
        $region46: #{decoder_module_forward.1} parent=43 // pred_check_branch
          %1497 = sbr.rel (%p1495) target = $region48
        $region47: #{decoder_module_forward.1} parent=43 // pred_region
          %s1499 = ssub.s32 1024, 1024
          %1500 = vsyncadd %s1491, %s1499
          %s1501 = smul.addr %s20, 16
          %s1502 = smul.addr %s1501, 64
          %s1503 = scalar_lea.hbm %s6, %s1502
          %s1504 = sshll.u32 %s1494, 4
          %s1505 = int_to_ptr.vmem [resolvable:$true] %s1504
          %1510 = dma.vmem_to_hbm [thread:$0]  %s1505, 1024, %s1503, %s1491, 64, 64, 4
        $region48: #{decoder_module_forward.1} parent=43 // pred_fallthru
          _
      $region44: #{decoder_module_forward.1} parent=5 // pred_fallthru
        _
      %p1511 = scmp.le.s32.totalorder 2, %s15
      // Predicated region
      $region49: #{decoder_module_forward.1} parent=5 // pred_check
        %p1512 = pneg %p1511
      $region50: #{decoder_module_forward.1} parent=5 // pred_check_branch
        %1514 = sbr.rel (%p1512) target = $region52
      $region51: #{decoder_module_forward.1} parent=5 // pred_region
        %s1515 = ssub.s32 %s15, 2
        // Predicated region
        $region53: #{decoder_module_forward.1} parent=51 // pred_check
          %p1516 = pneg %p175
        $region54: #{decoder_module_forward.1} parent=51 // pred_check_branch
          %1518 = sbr.rel (%p1516) target = $region56
        $region55: #{decoder_module_forward.1} parent=51 // pred_region
          %s1519 = sand.u32 %s160, 1
          %s1520 = scalar_lea.sflag [#allocation5], %s1519
          %s1521 = sand.u32 %s160, 1
          %s1522 = smul.addr %s1521, 64
          %s1523 = scalar_lea.vmem [#allocation4], %s1522
          %1524 = dma.done %s1520, 1024
        $region56: #{decoder_module_forward.1} parent=51 // pred_fallthru
          _
      $region52: #{decoder_module_forward.1} parent=5 // pred_fallthru
        _
    $region6: #{decoder_module_forward.1} parent=1 // loop_footer
      %s19 = sadd.s32 1, %s15
    $region7: #{decoder_module_forward.1} parent=1 // loop_footer_branch
      %14 = sbr.rel target = $region3
    $region8: #{decoder_module_forward.1} parent=1 // loop_exit
      _
    %1525 = vsyncpa [#allocation5], 1
    %s1526 = scalar_lea.sflag [#allocation5], 1
    %1527 = vsyncpa %s1526, 1

</llo_original>
